<compile_context>
chip_gen: v7x
topology: tpu7x:2x2x1
jax: 0.10.0
libtpu: 0.0.40
codegen_flags: <defaults>
</compile_context>

<pallas_src>
import jax
import jax.numpy as jnp
import numpy as np
from jax import lax
from jax.experimental import pallas as pl
from jax.experimental.pallas import tpu as pltpu


def make_kernel(N, C, H, W, matmul_dtype):
    HW = H * W
    NHW = N * HW
    SHIFTS = tuple(dy * W + dx for dy in (-1, 0, 1) for dx in (-1, 0, 1))

    def kernel(x_ref, wc_ref, bc_ref, g_ref, bt_ref,
               w1_ref, b1_ref, w2_ref, b2_ref,
               mask_ref, pool_ref, expand_ref, o_ref):
        x = x_ref[...]                                   # (C, NHW) f32
        wc = wc_ref[...]                                 # (C, 9*C), matmul dtype
        # host-precomputed per-tap validity masks, loaded once and reused by both convs
        tap_masks = [mask_ref[t:t + 1, :] for t in range(9)]       # each (1, NHW) f32

        def bn_relu(v):
            # BatchNorm2d(track_running_stats=False): always batch stats over (N, H, W).
            # Centered variance (more robust than E[x^2]-E[x]^2 for post-ReLU data).
            v = jnp.maximum(v, 0.0)
            m = jnp.mean(v, axis=1, keepdims=True)
            d = v - m
            var = jnp.mean(d * d, axis=1, keepdims=True)
            return g_ref[...] * d * lax.rsqrt(var + 1e-5) + bt_ref[...]

        def conv3x3(v):
            # Each 3x3 tap is a constant lane rotation (XLU) of the flat slab; wrap-around
            # lanes are always out-of-image and killed by the tap mask.  The 9 masked
            # slabs are stacked along sublanes so the channel contraction is one deep
            # (C, 9C) @ (9C, NHW) MXU matmul instead of 9 K=C matmuls.
            slabs = []
            for t, k in enumerate(SHIFTS):
                shifted = v if k == 0 else pltpu.roll(v, shift=(-k) % NHW, axis=1)
                slabs.append(shifted * tap_masks[t])
            stacked = jnp.concatenate(slabs, axis=0).astype(matmul_dtype)   # (9C, NHW)
            out = jnp.dot(wc, stacked, preferred_element_type=jnp.float32)
            return out + bc_ref[...]

        y = bn_relu(x)
        y = conv3x3(y)
        # TODO(synk): F.dropout2d with dropout_ratio=0 (the module default) is the
        # identity; a non-zero dropout ratio is not implemented.
        y = conv3x3(y)
        y = bn_relu(y)

        # --- Squeeze-and-Excite (use_senet=True), fully batched ---
        # global avg pool as a matmul: (C, NHW) @ (NHW, N) with 1/HW one-hot columns
        pooled = jnp.dot(y, pool_ref[...], preferred_element_type=jnp.float32)        # (C, N)
        h1 = jnp.maximum(
            jnp.dot(w1_ref[...], pooled, preferred_element_type=jnp.float32) + b1_ref[...],
            0.0)                                                                       # (C//r, N)
        se = jax.nn.sigmoid(
            jnp.dot(w2_ref[...], h1, preferred_element_type=jnp.float32) + b2_ref[...])  # (C, N)
        # broadcast the per-sample gate back to (C, NHW) with one tiny matmul
        gate = jnp.dot(se, expand_ref[...], preferred_element_type=jnp.float32)        # (C, NHW)

        # x.add_(input_block); activation=False (default) -> no trailing bn(relu)
        o_ref[...] = y * gate + x

    return kernel


def residual_block_pallas(x, params, matmul_dtype=jnp.float32):
    """x: (N, C, H, W) float32 (NCHW, like PyTorch).

    matmul_dtype=jnp.bfloat16 enables bf16 conv-matmul operands (f32 accumulation)
    for higher MXU throughput on v6e/v7x at slightly reduced precision.
    """
    N, C, H, W = x.shape
    HW = H * W
    NHW = N * HW

    # ---- plain-JAX / numpy glue: layout change + weight/mask repacking ----
    x2d = jnp.transpose(x, (1, 0, 2, 3)).reshape(C, NHW).astype(jnp.float32)
    # conv weight (O, I, 3, 3) -> (O, tap*I) with tap = ky*3 + kx, matching the
    # sublane-stacked activation slabs inside the kernel.
    wc = jnp.transpose(params["conv_w"], (0, 2, 3, 1)).reshape(C, 9 * C).astype(matmul_dtype)
    bc = params["conv_b"].reshape(C, 1).astype(jnp.float32)
    g = params["bn_gamma"].reshape(C, 1).astype(jnp.float32)
    bt = params["bn_beta"].reshape(C, 1).astype(jnp.float32)
    w1 = params["fc1_w"].astype(jnp.float32)
    b1 = params["fc1_b"].reshape(-1, 1).astype(jnp.float32)
    w2 = params["fc2_w"].astype(jnp.float32)
    b2 = params["fc2_b"].reshape(-1, 1).astype(jnp.float32)

    # tap validity masks (9, NHW), pooling (NHW, N) and gate-broadcast (N, NHW) matrices
    idx = np.arange(NHW)
    hh = (idx // W) % H
    ww = idx % W
    taps = [(dy, dx) for dy in (-1, 0, 1) for dx in (-1, 0, 1)]
    tap_masks = np.stack(
        [(((hh + dy) >= 0) & ((hh + dy) < H) & ((ww + dx) >= 0) & ((ww + dx) < W))
         .astype(np.float32) for dy, dx in taps])                       # (9, NHW)
    n_of = idx // HW
    pool_w = np.zeros((NHW, N), np.float32)
    pool_w[idx, n_of] = 1.0 / HW
    expand_w = np.zeros((N, NHW), np.float32)
    expand_w[n_of, idx] = 1.0

    kernel = make_kernel(N, C, H, W, matmul_dtype)

    vmem = lambda: pl.BlockSpec(memory_space=pltpu.MemorySpace.VMEM)
    itemsz = jnp.dtype(matmul_dtype).itemsize
    est_bytes = 4 * NHW * (8 * C + 9 + 3 * N) + 2 * 9 * C * NHW * itemsz
    vmem_limit = int(min(100 * 2**20, max(32 * 2**20, 2 * est_bytes + (2 << 20))))

    call = pl.pallas_call(
        kernel,
        out_shape=jax.ShapeDtypeStruct((C, NHW), jnp.float32),
        in_specs=[vmem() for _ in range(12)],
        out_specs=vmem(),
        input_output_aliases={0: 0},      # reuse the x-slab HBM buffer for the output
        compiler_params=pltpu.CompilerParams(vmem_limit_bytes=vmem_limit),
    )
    # jit+donate so the aliased input buffer is actually reused (no defensive copy)
    out2d = jax.jit(call, donate_argnums=(0,))(
        x2d, wc, bc, g, bt, w1, b1, w2, b2,
        jnp.asarray(tap_masks), jnp.asarray(pool_w), jnp.asarray(expand_w))

    return jnp.transpose(out2d.reshape(C, N, H, W), (1, 0, 2, 3))


def residual_block_ref(x, params):
    """Pure-JAX reference mirroring the PyTorch forward (defaults: p=0, use_senet=True)."""
    cw, cb = params["conv_w"], params["conv_b"]
    g, bt = params["bn_gamma"], params["bn_beta"]
    w1, b1, w2, b2 = params["fc1_w"], params["fc1_b"], params["fc2_w"], params["fc2_b"]

    def bn_relu(v):
        v = jnp.maximum(v, 0.0)
        m = jnp.mean(v, axis=(0, 2, 3), keepdims=True)
        d = v - m
        var = jnp.mean(d * d, axis=(0, 2, 3), keepdims=True)
        return (g.reshape(1, -1, 1, 1) * d * lax.rsqrt(var + 1e-5)
                + bt.reshape(1, -1, 1, 1))

    def conv(v):
        o = lax.conv_general_dilated(v, cw, (1, 1), ((1, 1), (1, 1)),
                                     dimension_numbers=("NCHW", "OIHW", "NCHW"))
        return o + cb.reshape(1, -1, 1, 1)

    y = bn_relu(x)
    y = conv(y)
    y = conv(y)
    y = bn_relu(y)
    se = jnp.mean(y, axis=(2, 3))                     # (N, C)
    se = jax.nn.relu(se @ w1.T + b1)
    se = jax.nn.sigmoid(se @ w2.T + b2)
    y = y * se[:, :, None, None]
    return y + x


if __name__ == "__main__":
    N, C, H, W, r = 2, 8, 16, 16, 4
    key = jax.random.PRNGKey(0)
    ks = jax.random.split(key, 9)
    params = {
        "conv_w": jax.random.normal(ks[0], (C, C, 3, 3), jnp.float32) * 0.15,
        "conv_b": jax.random.normal(ks[1], (C,), jnp.float32) * 0.05,
        "bn_gamma": 1.0 + 0.1 * jax.random.normal(ks[2], (C,), jnp.float32),
        "bn_beta": 0.1 * jax.random.normal(ks[3], (C,), jnp.float32),
        "fc1_w": jax.random.normal(ks[4], (C // r, C), jnp.float32) * 0.3,
        "fc1_b": jax.random.normal(ks[5], (C // r,), jnp.float32) * 0.05,
        "fc2_w": jax.random.normal(ks[6], (C, C // r), jnp.float32) * 0.3,
        "fc2_b": jax.random.normal(ks[7], (C,), jnp.float32) * 0.05,
    }
    x = jax.random.normal(ks[8], (N, C, H, W), jnp.float32)

    out = residual_block_pallas(x, params)            # f32 matmul operands (default)
    out = jax.block_until_ready(out)

    ref = residual_block_ref(x, params)
    np.testing.assert_allclose(np.asarray(out), np.asarray(ref), rtol=2e-3, atol=2e-3)
    print("KERNEL_OK")
</pallas_src>

<mosaic_0001>
module attributes {stable_mosaic.version = 11 : i64} {
  func.func @kernel(%arg0: memref<8x512xf32, #tpu.memory_space<vmem>>, %arg1: memref<8x72xf32, #tpu.memory_space<vmem>>, %arg2: memref<8x1xf32, #tpu.memory_space<vmem>>, %arg3: memref<8x1xf32, #tpu.memory_space<vmem>>, %arg4: memref<8x1xf32, #tpu.memory_space<vmem>>, %arg5: memref<2x8xf32, #tpu.memory_space<vmem>>, %arg6: memref<2x1xf32, #tpu.memory_space<vmem>>, %arg7: memref<8x2xf32, #tpu.memory_space<vmem>>, %arg8: memref<8x1xf32, #tpu.memory_space<vmem>>, %arg9: memref<9x512xf32, #tpu.memory_space<vmem>>, %arg10: memref<512x2xf32, #tpu.memory_space<vmem>>, %arg11: memref<2x512xf32, #tpu.memory_space<vmem>>, %arg12: memref<8x512xf32, #tpu.memory_space<vmem>>) attributes {dimension_semantics = [], scalar_prefetch = 0 : i64, scratch_operands = 0 : i64, tpu.core_type = #tpu.core_type<tc>} {
    %c0 = arith.constant 0 : index
    %c0_0 = arith.constant 0 : index
    %0 = vector.load %arg0[%c0, %c0_0] : memref<8x512xf32, #tpu.memory_space<vmem>>, vector<8x512xf32>
    %c0_1 = arith.constant 0 : index
    %c0_2 = arith.constant 0 : index
    %1 = vector.load %arg1[%c0_1, %c0_2] : memref<8x72xf32, #tpu.memory_space<vmem>>, vector<8x72xf32>
    %c0_3 = arith.constant 0 : index
    %c0_4 = arith.constant 0 : index
    %2 = vector.load %arg9[%c0_3, %c0_4] : memref<9x512xf32, #tpu.memory_space<vmem>>, vector<1x512xf32>
    %c1 = arith.constant 1 : index
    %c0_5 = arith.constant 0 : index
    %3 = vector.load %arg9[%c1, %c0_5] : memref<9x512xf32, #tpu.memory_space<vmem>>, vector<1x512xf32>
    %c2 = arith.constant 2 : index
    %c0_6 = arith.constant 0 : index
    %4 = vector.load %arg9[%c2, %c0_6] : memref<9x512xf32, #tpu.memory_space<vmem>>, vector<1x512xf32>
    %c3 = arith.constant 3 : index
    %c0_7 = arith.constant 0 : index
    %5 = vector.load %arg9[%c3, %c0_7] : memref<9x512xf32, #tpu.memory_space<vmem>>, vector<1x512xf32>
    %c4 = arith.constant 4 : index
    %c0_8 = arith.constant 0 : index
    %6 = vector.load %arg9[%c4, %c0_8] : memref<9x512xf32, #tpu.memory_space<vmem>>, vector<1x512xf32>
    %c5 = arith.constant 5 : index
    %c0_9 = arith.constant 0 : index
    %7 = vector.load %arg9[%c5, %c0_9] : memref<9x512xf32, #tpu.memory_space<vmem>>, vector<1x512xf32>
    %c6 = arith.constant 6 : index
    %c0_10 = arith.constant 0 : index
    %8 = vector.load %arg9[%c6, %c0_10] : memref<9x512xf32, #tpu.memory_space<vmem>>, vector<1x512xf32>
    %c7 = arith.constant 7 : index
    %c0_11 = arith.constant 0 : index
    %9 = vector.load %arg9[%c7, %c0_11] : memref<9x512xf32, #tpu.memory_space<vmem>>, vector<1x512xf32>
    %c8 = arith.constant 8 : index
    %c0_12 = arith.constant 0 : index
    %10 = vector.load %arg9[%c8, %c0_12] : memref<9x512xf32, #tpu.memory_space<vmem>>, vector<1x512xf32>
    %cst = arith.constant 0.000000e+00 : f32
    %11 = vector.broadcast %cst : f32 to vector<8x512xf32>
    %12 = arith.maximumf %0, %11 : vector<8x512xf32>
    %cst_13 = arith.constant dense<0.000000e+00> : vector<8xf32>
    %13 = vector.multi_reduction <add>, %12, %cst_13 [1] : vector<8x512xf32> to vector<8xf32>
    %14 = vector.shape_cast %13 : vector<8xf32> to vector<8x1xf32>
    %cst_14 = arith.constant 5.120000e+02 : f32
    %15 = vector.broadcast %cst_14 : f32 to vector<8x1xf32>
    %16 = arith.divf %14, %15 : vector<8x1xf32>
    %17 = vector.broadcast %16 : vector<8x1xf32> to vector<8x512xf32>
    %18 = arith.subf %12, %17 : vector<8x512xf32>
    %19 = arith.mulf %18, %18 : vector<8x512xf32>
    %cst_15 = arith.constant dense<0.000000e+00> : vector<8xf32>
    %20 = vector.multi_reduction <add>, %19, %cst_15 [1] : vector<8x512xf32> to vector<8xf32>
    %21 = vector.shape_cast %20 : vector<8xf32> to vector<8x1xf32>
    %cst_16 = arith.constant 5.120000e+02 : f32
    %22 = vector.broadcast %cst_16 : f32 to vector<8x1xf32>
    %23 = arith.divf %21, %22 : vector<8x1xf32>
    %c0_17 = arith.constant 0 : index
    %c0_18 = arith.constant 0 : index
    %24 = vector.load %arg3[%c0_17, %c0_18] : memref<8x1xf32, #tpu.memory_space<vmem>>, vector<8x1xf32>
    %25 = vector.broadcast %24 : vector<8x1xf32> to vector<8x512xf32>
    %26 = arith.mulf %25, %18 : vector<8x512xf32>
    %cst_19 = arith.constant 9.99999974E-6 : f32
    %27 = vector.broadcast %cst_19 : f32 to vector<8x1xf32>
    %28 = arith.addf %23, %27 : vector<8x1xf32>
    %29 = math.rsqrt %28 : vector<8x1xf32>
    %30 = vector.broadcast %29 : vector<8x1xf32> to vector<8x512xf32>
    %31 = arith.mulf %26, %30 : vector<8x512xf32>
    %c0_20 = arith.constant 0 : index
    %c0_21 = arith.constant 0 : index
    %32 = vector.load %arg4[%c0_20, %c0_21] : memref<8x1xf32, #tpu.memory_space<vmem>>, vector<8x1xf32>
    %33 = vector.broadcast %32 : vector<8x1xf32> to vector<8x512xf32>
    %34 = arith.addf %31, %33 : vector<8x512xf32>
    %c17_i32 = arith.constant 17 : i32
    %35 = tpu.dynamic_rotate %34 by %c17_i32 dim 1 : vector<8x512xf32>, i32 -> vector<8x512xf32>
    %36 = vector.broadcast %2 : vector<1x512xf32> to vector<8x512xf32>
    %37 = arith.mulf %35, %36 : vector<8x512xf32>
    %c16_i32 = arith.constant 16 : i32
    %38 = tpu.dynamic_rotate %34 by %c16_i32 dim 1 : vector<8x512xf32>, i32 -> vector<8x512xf32>
    %39 = vector.broadcast %3 : vector<1x512xf32> to vector<8x512xf32>
    %40 = arith.mulf %38, %39 : vector<8x512xf32>
    %c15_i32 = arith.constant 15 : i32
    %41 = tpu.dynamic_rotate %34 by %c15_i32 dim 1 : vector<8x512xf32>, i32 -> vector<8x512xf32>
    %42 = vector.broadcast %4 : vector<1x512xf32> to vector<8x512xf32>
    %43 = arith.mulf %41, %42 : vector<8x512xf32>
    %c1_i32 = arith.constant 1 : i32
    %44 = tpu.dynamic_rotate %34 by %c1_i32 dim 1 : vector<8x512xf32>, i32 -> vector<8x512xf32>
    %45 = vector.broadcast %5 : vector<1x512xf32> to vector<8x512xf32>
    %46 = arith.mulf %44, %45 : vector<8x512xf32>
    %47 = vector.broadcast %6 : vector<1x512xf32> to vector<8x512xf32>
    %48 = arith.mulf %34, %47 : vector<8x512xf32>
    %c511_i32 = arith.constant 511 : i32
    %49 = tpu.dynamic_rotate %34 by %c511_i32 dim 1 : vector<8x512xf32>, i32 -> vector<8x512xf32>
    %50 = vector.broadcast %7 : vector<1x512xf32> to vector<8x512xf32>
    %51 = arith.mulf %49, %50 : vector<8x512xf32>
    %c497_i32 = arith.constant 497 : i32
    %52 = tpu.dynamic_rotate %34 by %c497_i32 dim 1 : vector<8x512xf32>, i32 -> vector<8x512xf32>
    %53 = vector.broadcast %8 : vector<1x512xf32> to vector<8x512xf32>
    %54 = arith.mulf %52, %53 : vector<8x512xf32>
    %c496_i32 = arith.constant 496 : i32
    %55 = tpu.dynamic_rotate %34 by %c496_i32 dim 1 : vector<8x512xf32>, i32 -> vector<8x512xf32>
    %56 = vector.broadcast %9 : vector<1x512xf32> to vector<8x512xf32>
    %57 = arith.mulf %55, %56 : vector<8x512xf32>
    %c495_i32 = arith.constant 495 : i32
    %58 = tpu.dynamic_rotate %34 by %c495_i32 dim 1 : vector<8x512xf32>, i32 -> vector<8x512xf32>
    %59 = vector.broadcast %10 : vector<1x512xf32> to vector<8x512xf32>
    %60 = arith.mulf %58, %59 : vector<8x512xf32>
    %61 = tpu.concatenate %37, %40, %43, %46, %48, %51, %54, %57, %60 in 0 : vector<8x512xf32>, vector<8x512xf32>, vector<8x512xf32>, vector<8x512xf32>, vector<8x512xf32>, vector<8x512xf32>, vector<8x512xf32>, vector<8x512xf32>, vector<8x512xf32> -> vector<72x512xf32>
    %cst_22 = arith.constant dense<0.000000e+00> : vector<8x512xf32>
    %62 = tpu.matmul %1, %61, %cst_22 {dimension_numbers = #tpu.dot_dimension_numbers<[1], [0], [0], [1], [0, 0, 1, 1], [], []>} : vector<8x72xf32>, vector<72x512xf32>, vector<8x512xf32> -> vector<8x512xf32>
    %c0_23 = arith.constant 0 : index
    %c0_24 = arith.constant 0 : index
    %63 = vector.load %arg2[%c0_23, %c0_24] : memref<8x1xf32, #tpu.memory_space<vmem>>, vector<8x1xf32>
    %64 = vector.broadcast %63 : vector<8x1xf32> to vector<8x512xf32>
    %65 = arith.addf %62, %64 : vector<8x512xf32>
    %c17_i32_25 = arith.constant 17 : i32
    %66 = tpu.dynamic_rotate %65 by %c17_i32_25 dim 1 : vector<8x512xf32>, i32 -> vector<8x512xf32>
    %67 = vector.broadcast %2 : vector<1x512xf32> to vector<8x512xf32>
    %68 = arith.mulf %66, %67 : vector<8x512xf32>
    %c16_i32_26 = arith.constant 16 : i32
    %69 = tpu.dynamic_rotate %65 by %c16_i32_26 dim 1 : vector<8x512xf32>, i32 -> vector<8x512xf32>
    %70 = vector.broadcast %3 : vector<1x512xf32> to vector<8x512xf32>
    %71 = arith.mulf %69, %70 : vector<8x512xf32>
    %c15_i32_27 = arith.constant 15 : i32
    %72 = tpu.dynamic_rotate %65 by %c15_i32_27 dim 1 : vector<8x512xf32>, i32 -> vector<8x512xf32>
    %73 = vector.broadcast %4 : vector<1x512xf32> to vector<8x512xf32>
    %74 = arith.mulf %72, %73 : vector<8x512xf32>
    %c1_i32_28 = arith.constant 1 : i32
    %75 = tpu.dynamic_rotate %65 by %c1_i32_28 dim 1 : vector<8x512xf32>, i32 -> vector<8x512xf32>
    %76 = vector.broadcast %5 : vector<1x512xf32> to vector<8x512xf32>
    %77 = arith.mulf %75, %76 : vector<8x512xf32>
    %78 = vector.broadcast %6 : vector<1x512xf32> to vector<8x512xf32>
    %79 = arith.mulf %65, %78 : vector<8x512xf32>
    %c511_i32_29 = arith.constant 511 : i32
    %80 = tpu.dynamic_rotate %65 by %c511_i32_29 dim 1 : vector<8x512xf32>, i32 -> vector<8x512xf32>
    %81 = vector.broadcast %7 : vector<1x512xf32> to vector<8x512xf32>
    %82 = arith.mulf %80, %81 : vector<8x512xf32>
    %c497_i32_30 = arith.constant 497 : i32
    %83 = tpu.dynamic_rotate %65 by %c497_i32_30 dim 1 : vector<8x512xf32>, i32 -> vector<8x512xf32>
    %84 = vector.broadcast %8 : vector<1x512xf32> to vector<8x512xf32>
    %85 = arith.mulf %83, %84 : vector<8x512xf32>
    %c496_i32_31 = arith.constant 496 : i32
    %86 = tpu.dynamic_rotate %65 by %c496_i32_31 dim 1 : vector<8x512xf32>, i32 -> vector<8x512xf32>
    %87 = vector.broadcast %9 : vector<1x512xf32> to vector<8x512xf32>
    %88 = arith.mulf %86, %87 : vector<8x512xf32>
    %c495_i32_32 = arith.constant 495 : i32
    %89 = tpu.dynamic_rotate %65 by %c495_i32_32 dim 1 : vector<8x512xf32>, i32 -> vector<8x512xf32>
    %90 = vector.broadcast %10 : vector<1x512xf32> to vector<8x512xf32>
    %91 = arith.mulf %89, %90 : vector<8x512xf32>
    %92 = tpu.concatenate %68, %71, %74, %77, %79, %82, %85, %88, %91 in 0 : vector<8x512xf32>, vector<8x512xf32>, vector<8x512xf32>, vector<8x512xf32>, vector<8x512xf32>, vector<8x512xf32>, vector<8x512xf32>, vector<8x512xf32>, vector<8x512xf32> -> vector<72x512xf32>
    %cst_33 = arith.constant dense<0.000000e+00> : vector<8x512xf32>
    %93 = tpu.matmul %1, %92, %cst_33 {dimension_numbers = #tpu.dot_dimension_numbers<[1], [0], [0], [1], [0, 0, 1, 1], [], []>} : vector<8x72xf32>, vector<72x512xf32>, vector<8x512xf32> -> vector<8x512xf32>
    %c0_34 = arith.constant 0 : index
    %c0_35 = arith.constant 0 : index
    %94 = vector.load %arg2[%c0_34, %c0_35] : memref<8x1xf32, #tpu.memory_space<vmem>>, vector<8x1xf32>
    %95 = vector.broadcast %94 : vector<8x1xf32> to vector<8x512xf32>
    %96 = arith.addf %93, %95 : vector<8x512xf32>
    %cst_36 = arith.constant 0.000000e+00 : f32
    %97 = vector.broadcast %cst_36 : f32 to vector<8x512xf32>
    %98 = arith.maximumf %96, %97 : vector<8x512xf32>
    %cst_37 = arith.constant dense<0.000000e+00> : vector<8xf32>
    %99 = vector.multi_reduction <add>, %98, %cst_37 [1] : vector<8x512xf32> to vector<8xf32>
    %100 = vector.shape_cast %99 : vector<8xf32> to vector<8x1xf32>
    %cst_38 = arith.constant 5.120000e+02 : f32
    %101 = vector.broadcast %cst_38 : f32 to vector<8x1xf32>
    %102 = arith.divf %100, %101 : vector<8x1xf32>
    %103 = vector.broadcast %102 : vector<8x1xf32> to vector<8x512xf32>
    %104 = arith.subf %98, %103 : vector<8x512xf32>
    %105 = arith.mulf %104, %104 : vector<8x512xf32>
    %cst_39 = arith.constant dense<0.000000e+00> : vector<8xf32>
    %106 = vector.multi_reduction <add>, %105, %cst_39 [1] : vector<8x512xf32> to vector<8xf32>
    %107 = vector.shape_cast %106 : vector<8xf32> to vector<8x1xf32>
    %cst_40 = arith.constant 5.120000e+02 : f32
    %108 = vector.broadcast %cst_40 : f32 to vector<8x1xf32>
    %109 = arith.divf %107, %108 : vector<8x1xf32>
    %c0_41 = arith.constant 0 : index
    %c0_42 = arith.constant 0 : index
    %110 = vector.load %arg3[%c0_41, %c0_42] : memref<8x1xf32, #tpu.memory_space<vmem>>, vector<8x1xf32>
    %111 = vector.broadcast %110 : vector<8x1xf32> to vector<8x512xf32>
    %112 = arith.mulf %111, %104 : vector<8x512xf32>
    %cst_43 = arith.constant 9.99999974E-6 : f32
    %113 = vector.broadcast %cst_43 : f32 to vector<8x1xf32>
    %114 = arith.addf %109, %113 : vector<8x1xf32>
    %115 = math.rsqrt %114 : vector<8x1xf32>
    %116 = vector.broadcast %115 : vector<8x1xf32> to vector<8x512xf32>
    %117 = arith.mulf %112, %116 : vector<8x512xf32>
    %c0_44 = arith.constant 0 : index
    %c0_45 = arith.constant 0 : index
    %118 = vector.load %arg4[%c0_44, %c0_45] : memref<8x1xf32, #tpu.memory_space<vmem>>, vector<8x1xf32>
    %119 = vector.broadcast %118 : vector<8x1xf32> to vector<8x512xf32>
    %120 = arith.addf %117, %119 : vector<8x512xf32>
    %c0_46 = arith.constant 0 : index
    %c0_47 = arith.constant 0 : index
    %121 = vector.load %arg10[%c0_46, %c0_47] : memref<512x2xf32, #tpu.memory_space<vmem>>, vector<512x2xf32>
    %cst_48 = arith.constant dense<0.000000e+00> : vector<8x2xf32>
    %122 = tpu.matmul %120, %121, %cst_48 {dimension_numbers = #tpu.dot_dimension_numbers<[1], [0], [0], [1], [0, 0, 1, 1], [], []>} : vector<8x512xf32>, vector<512x2xf32>, vector<8x2xf32> -> vector<8x2xf32>
    %c0_49 = arith.constant 0 : index
    %c0_50 = arith.constant 0 : index
    %123 = vector.load %arg5[%c0_49, %c0_50] : memref<2x8xf32, #tpu.memory_space<vmem>>, vector<2x8xf32>
    %cst_51 = arith.constant dense<0.000000e+00> : vector<2x2xf32>
    %124 = tpu.matmul %123, %122, %cst_51 {dimension_numbers = #tpu.dot_dimension_numbers<[1], [0], [0], [1], [0, 0, 1, 1], [], []>} : vector<2x8xf32>, vector<8x2xf32>, vector<2x2xf32> -> vector<2x2xf32>
    %c0_52 = arith.constant 0 : index
    %c0_53 = arith.constant 0 : index
    %125 = vector.load %arg6[%c0_52, %c0_53] : memref<2x1xf32, #tpu.memory_space<vmem>>, vector<2x1xf32>
    %126 = vector.broadcast %125 : vector<2x1xf32> to vector<2x2xf32>
    %127 = arith.addf %124, %126 : vector<2x2xf32>
    %cst_54 = arith.constant 0.000000e+00 : f32
    %128 = vector.broadcast %cst_54 : f32 to vector<2x2xf32>
    %129 = arith.maximumf %127, %128 : vector<2x2xf32>
    %c0_55 = arith.constant 0 : index
    %c0_56 = arith.constant 0 : index
    %130 = vector.load %arg7[%c0_55, %c0_56] : memref<8x2xf32, #tpu.memory_space<vmem>>, vector<8x2xf32>
    %cst_57 = arith.constant dense<0.000000e+00> : vector<8x2xf32>
    %131 = tpu.matmul %130, %129, %cst_57 {dimension_numbers = #tpu.dot_dimension_numbers<[1], [0], [0], [1], [0, 0, 1, 1], [], []>} : vector<8x2xf32>, vector<2x2xf32>, vector<8x2xf32> -> vector<8x2xf32>
    %c0_58 = arith.constant 0 : index
    %c0_59 = arith.constant 0 : index
    %132 = vector.load %arg8[%c0_58, %c0_59] : memref<8x1xf32, #tpu.memory_space<vmem>>, vector<8x1xf32>
    %133 = vector.broadcast %132 : vector<8x1xf32> to vector<8x2xf32>
    %134 = arith.addf %131, %133 : vector<8x2xf32>
    %135 = arith.negf %134 : vector<8x2xf32>
    %136 = math.exp %135 : vector<8x2xf32>
    %cst_60 = arith.constant 1.000000e+00 : f32
    %137 = vector.broadcast %cst_60 : f32 to vector<8x2xf32>
    %138 = arith.addf %137, %136 : vector<8x2xf32>
    %139 = arith.divf %137, %138 : vector<8x2xf32>
    %c0_61 = arith.constant 0 : index
    %c0_62 = arith.constant 0 : index
    %140 = vector.load %arg11[%c0_61, %c0_62] : memref<2x512xf32, #tpu.memory_space<vmem>>, vector<2x512xf32>
    %cst_63 = arith.constant dense<0.000000e+00> : vector<8x512xf32>
    %141 = tpu.matmul %139, %140, %cst_63 {dimension_numbers = #tpu.dot_dimension_numbers<[1], [0], [0], [1], [0, 0, 1, 1], [], []>} : vector<8x2xf32>, vector<2x512xf32>, vector<8x512xf32> -> vector<8x512xf32>
    %142 = arith.mulf %120, %141 : vector<8x512xf32>
    %143 = arith.addf %142, %0 : vector<8x512xf32>
    %c0_64 = arith.constant 0 : index
    %c0_65 = arith.constant 0 : index
    %144 = vector.load %arg12[%c0_64, %c0_65] : memref<8x512xf32, #tpu.memory_space<vmem>>, vector<8x512xf32>
    tpu.vector_store %arg12[%c0_64, %c0_65], %143 {strides = array<i32>} : memref<8x512xf32, #tpu.memory_space<vmem>>, vector<8x512xf32>,
    return
  }
}

</mosaic_0001>

<llo_original>
// kernel: tpu_custom_call.1
$region0: #{tpu_custom_call.1}
  #allocation0 [shape = 'u32[]', space=smem, size = 0x4, offset = 0x4, fixed_abs, tag = 'smem constant byte address 0x4 - core index']
  #allocation1 [shape = 'u32[144,128]{1,0:T(1,128)}', space=vmem, size = 0x12000, scoped, tag = 'internal scratch']
  %s0 = inlined_call_operand.hbm [shape: f32[8,512], index: 0, kind: input, shape index: {}, may-alias: {0,12}]
  %s1 = inlined_call_operand.vmem [shape: f32[8,72], index: 1, kind: input, shape index: {}]
  %s2 = inlined_call_operand.vmem [shape: f32[8,1], index: 2, kind: input, shape index: {}]
  %s3 = inlined_call_operand.vmem [shape: f32[8,1], index: 3, kind: input, shape index: {}]
  %s4 = inlined_call_operand.vmem [shape: f32[8,1], index: 4, kind: input, shape index: {}]
  %s5 = inlined_call_operand.vmem [shape: f32[2,8], index: 5, kind: input, shape index: {}]
  %s6 = inlined_call_operand.vmem [shape: f32[2,1], index: 6, kind: input, shape index: {}]
  %s7 = inlined_call_operand.vmem [shape: f32[8,2], index: 7, kind: input, shape index: {}]
  %s8 = inlined_call_operand.vmem [shape: f32[8,1], index: 8, kind: input, shape index: {}]
  %s9 = inlined_call_operand.vmem [shape: f32[9,512], index: 9, kind: input, shape index: {}]
  %s10 = inlined_call_operand.vmem [shape: f32[512,2], index: 10, kind: input, shape index: {}]
  %s11 = inlined_call_operand.vmem [shape: f32[2,512], index: 11, kind: input, shape index: {}]
  %s12 = inlined_call_operand.hbm [shape: f32[8,512], index: 12, kind: output, shape index: {}, may-alias: {0,12}]
  %s13 = sld [smem:[#allocation0]]
  $region62: #{tpu_custom_call.1} parent=0
    _
  %s15 = ssub.s32 1, %s13
  %s16 = scalar_select 0, %s15, %s13
  $region1: #{tpu_custom_call.1} parent=0
    #allocation2 [shape = 'u8[16384]{0}', space=vmem, size = 0x4000, scoped, tag = 'input window, operand 0, single buffered']
    #allocation3 [shape = 's32[1]{0}', space=sflag, size = 0x4, scoped, tag = 'scoped memory for tpu_custom_call.1']
    #allocation4 [shape = 's32[1]{0}', space=sflag, size = 0x4, scoped, tag = 'scoped memory for tpu_custom_call.1']
    #allocation5 [shape = 'u8[16384]{0}', space=vmem, size = 0x4000, scoped, tag = 'output window, operand 0, single buffered']
    %17 = vsyncpa [#allocation3], 0
    %18 = vsyncpa [#allocation4], 0
    // Predicated region
    $region2: #{tpu_custom_call.1} parent=1 // pred_check
      _
    $region3: #{tpu_custom_call.1} parent=1 // pred_check_branch
      %20 = sbr.rel (0) target = $region5
    $region4: #{tpu_custom_call.1} parent=1 // pred_region
      %s22 = ssub.s32 512, 512
      %23 = vsyncadd [#allocation3], %s22
      %s25 = sshll.u32 [#allocation2], 4
      %s26 = int_to_ptr.vmem [resolvable:$true] %s25
      %28 = dma.hbm_to_vmem [thread:$0]  %s0, 512, %s26, [#allocation3]
    $region5: #{tpu_custom_call.1} parent=1 // pred_fallthru
      _
    // Predicated region
    $region6: #{tpu_custom_call.1} parent=1 // pred_check
      _
    $region7: #{tpu_custom_call.1} parent=1 // pred_check_branch
      %30 = sbr.rel (0) target = $region9
    $region8: #{tpu_custom_call.1} parent=1 // pred_region
      _
    $region9: #{tpu_custom_call.1} parent=1 // pred_fallthru
      _
    // Predicated region
    $region10: #{tpu_custom_call.1} parent=1 // pred_check
      _
    $region11: #{tpu_custom_call.1} parent=1 // pred_check_branch
      %32 = sbr.rel (0) target = $region13
    $region12: #{tpu_custom_call.1} parent=1 // pred_region
      _
    $region13: #{tpu_custom_call.1} parent=1 // pred_fallthru
      _
    // Predicated region
    $region14: #{tpu_custom_call.1} parent=1 // pred_check
      _
    $region15: #{tpu_custom_call.1} parent=1 // pred_check_branch
      %34 = sbr.rel (0) target = $region17
    $region16: #{tpu_custom_call.1} parent=1 // pred_region
      _
    $region17: #{tpu_custom_call.1} parent=1 // pred_fallthru
      _
    // Predicated region
    $region18: #{tpu_custom_call.1} parent=1 // pred_check
      _
    $region19: #{tpu_custom_call.1} parent=1 // pred_check_branch
      %36 = sbr.rel (0) target = $region21
    $region20: #{tpu_custom_call.1} parent=1 // pred_region
      _
    $region21: #{tpu_custom_call.1} parent=1 // pred_fallthru
      _
    // Predicated region
    $region22: #{tpu_custom_call.1} parent=1 // pred_check
      _
    $region23: #{tpu_custom_call.1} parent=1 // pred_check_branch
      %38 = sbr.rel (0) target = $region25
    $region24: #{tpu_custom_call.1} parent=1 // pred_region
      _
    $region25: #{tpu_custom_call.1} parent=1 // pred_fallthru
      _
    // Predicated region
    $region26: #{tpu_custom_call.1} parent=1 // pred_check
      _
    $region27: #{tpu_custom_call.1} parent=1 // pred_check_branch
      %40 = sbr.rel (0) target = $region29
    $region28: #{tpu_custom_call.1} parent=1 // pred_region
      _
    $region29: #{tpu_custom_call.1} parent=1 // pred_fallthru
      _
    // Predicated region
    $region30: #{tpu_custom_call.1} parent=1 // pred_check
      _
    $region31: #{tpu_custom_call.1} parent=1 // pred_check_branch
      %42 = sbr.rel (0) target = $region33
    $region32: #{tpu_custom_call.1} parent=1 // pred_region
      _
    $region33: #{tpu_custom_call.1} parent=1 // pred_fallthru
      _
    // Predicated region
    $region34: #{tpu_custom_call.1} parent=1 // pred_check
      _
    $region35: #{tpu_custom_call.1} parent=1 // pred_check_branch
      %44 = sbr.rel (0) target = $region37
    $region36: #{tpu_custom_call.1} parent=1 // pred_region
      _
    $region37: #{tpu_custom_call.1} parent=1 // pred_fallthru
      _
    // Predicated region
    $region38: #{tpu_custom_call.1} parent=1 // pred_check
      _
    $region39: #{tpu_custom_call.1} parent=1 // pred_check_branch
      %46 = sbr.rel (0) target = $region41
    $region40: #{tpu_custom_call.1} parent=1 // pred_region
      _
    $region41: #{tpu_custom_call.1} parent=1 // pred_fallthru
      _
    // Predicated region
    $region42: #{tpu_custom_call.1} parent=1 // pred_check
      _
    $region43: #{tpu_custom_call.1} parent=1 // pred_check_branch
      %48 = sbr.rel (0) target = $region45
    $region44: #{tpu_custom_call.1} parent=1 // pred_region
      _
    $region45: #{tpu_custom_call.1} parent=1 // pred_fallthru
      _
    // Predicated region
    $region46: #{tpu_custom_call.1} parent=1 // pred_check
      _
    $region47: #{tpu_custom_call.1} parent=1 // pred_check_branch
      %50 = sbr.rel (0) target = $region49
    $region48: #{tpu_custom_call.1} parent=1 // pred_region
      _
    $region49: #{tpu_custom_call.1} parent=1 // pred_fallthru
      _
    // Predicated region
    $region50: #{tpu_custom_call.1} parent=1 // pred_check
      _
    $region51: #{tpu_custom_call.1} parent=1 // pred_check_branch
      %52 = sbr.rel (0) target = $region53
    $region52: #{tpu_custom_call.1} parent=1 // pred_region
      %53 = dma.done [#allocation3], 512
    $region53: #{tpu_custom_call.1} parent=1 // pred_fallthru
      _
    %v54 = vld [vmem:[#allocation2] sm:$0xff]
    %v55 = vld [vmem:[#allocation2 + $0x8] sm:$0xff]
    %v56 = vld [vmem:[#allocation2 + $0x10] sm:$0xff]
    %v57 = vld [vmem:[#allocation2 + $0x18] sm:$0xff]
    %v58 = vld [vmem:[%s1] sm:$0xff]
    %v59 = vld [vmem:[%s9] ss:$8 sm:$0xf]
    %s60 = scalar_lea.vmem %s9, 1
    %v61 = vld [vmem:[%s60] ss:$8 sm:$0xf]
    %s62 = scalar_lea.vmem %s9, 2
    %v63 = vld [vmem:[%s62] ss:$8 sm:$0xf]
    %s64 = scalar_lea.vmem %s9, 3
    %v65 = vld [vmem:[%s64] ss:$8 sm:$0xf]
    %s66 = scalar_lea.vmem %s9, 4
    %v67 = vld [vmem:[%s66] ss:$8 sm:$0xf]
    %s68 = scalar_lea.vmem %s9, 5
    %v69 = vld [vmem:[%s68] ss:$8 sm:$0xf]
    %s70 = scalar_lea.vmem %s9, 6
    %v71 = vld [vmem:[%s70] ss:$8 sm:$0xf]
    %s72 = scalar_lea.vmem %s9, 7
    %v73 = vld [vmem:[%s72] ss:$8 sm:$0xf]
    %s74 = scalar_lea.vmem %s9, 32
    %v75 = vld [vmem:[%s74] ss:$8 sm:$0xf]
    %v76 = vmax.f32 %v54, 0.0
    %v77 = vmax.f32 %v55, 0.0
    %v78 = vmax.f32 %v56, 0.0
    %v79 = vmax.f32 %v57, 0.0
    %v80 = vadd.f32 %v76, %v77
    %v81 = vadd.f32 %v80, %v78
    %v82 = vadd.f32 %v81, %v79
    %83 = vadd.xlane.f32.xlu0 %v82
    %v84 = vpop.xlane.xlu0 %83
    %v85 = vrcp.pop 512.0
    %v86 = vmul.f32 %v84, %v85
    %v87 = vsub.f32 %v76, %v86
    %v88 = vsub.f32 %v77, %v86
    %v89 = vsub.f32 %v78, %v86
    %v90 = vsub.f32 %v79, %v86
    %v91 = vmul.f32 %v87, %v87
    %v92 = vmul.f32 %v88, %v88
    %v93 = vmul.f32 %v89, %v89
    %v94 = vmul.f32 %v90, %v90
    %v95 = vadd.f32 %v91, %v92
    %v96 = vadd.f32 %v95, %v93
    %v97 = vadd.f32 %v96, %v94
    %98 = vadd.xlane.f32.xlu0 %v97
    %v99 = vpop.xlane.xlu0 %98
    %v100 = vmul.f32 %v99, %v85
    %v101 = vld [vmem:[%s3] sm:$0xff]
    %103 = vset.pattern.permute.xlu0 0
    %104 = vperm.xlu0 %103, %v101
    %v105 = vpop.permute.xlu0 %104
    %v107 = vmul.f32 %v105, %v87
    %v108 = vmul.f32 %v105, %v88
    %v109 = vmul.f32 %v105, %v89
    %v110 = vmul.f32 %v105, %v90
    %v111 = vadd.f32 %v100, 1e-05
    %v112 = vrsqrt.pop %v111
    %v113 = vmul.f32 %v107, %v112
    %v114 = vmul.f32 %v108, %v112
    %v115 = vmul.f32 %v109, %v112
    %v116 = vmul.f32 %v110, %v112
    %v117 = vld [vmem:[%s4] sm:$0xff]
    %119 = vset.pattern.permute.xlu0 0
    %120 = vperm.xlu0 %119, %v117
    %v121 = vpop.permute.xlu0 %120
    %v123 = vadd.f32 %v113, %v121
    %v124 = vadd.f32 %v114, %v121
    %v125 = vadd.f32 %v115, %v121
    %v126 = vadd.f32 %v116, %v121
    %127 = vrot.lane.b32.xlu0 %v123, 17
    %v128 = vpop.permute.xlu0 %127
    %129 = vrot.lane.b32.xlu0 %v124, 17
    %v130 = vpop.permute.xlu0 %129
    %131 = vrot.lane.b32.xlu0 %v125, 17
    %v132 = vpop.permute.xlu0 %131
    %133 = vrot.lane.b32.xlu0 %v126, 17
    %v134 = vpop.permute.xlu0 %133
    %v135 = vlaneseq
    %v136 = vand.u32 %v135, 127
    %vm137 = vcmp.lt.s32.totalorder %v136, 17
    %v138 = vsel %vm137, %v132, %v134
    %v139 = vsel %vm137, %v130, %v132
    %v140 = vsel %vm137, %v128, %v130
    %v141 = vsel %vm137, %v134, %v128
    %v143 = vlaneseq
    %v144 = vshrl.u32 %v143, 7
    %v145 = vsub.s32 0, %v144
    %v146 = vrot.slane %v59, %v145
    %v147 = vlaneseq
    %v148 = vshrl.u32 %v147, 7
    %v149 = vsub.s32 1, %v148
    %v150 = vrot.slane %v59, %v149
    %v151 = vlaneseq
    %v152 = vshrl.u32 %v151, 7
    %v153 = vsub.s32 2, %v152
    %v154 = vrot.slane %v59, %v153
    %v155 = vlaneseq
    %v156 = vshrl.u32 %v155, 7
    %v157 = vsub.s32 3, %v156
    %v158 = vrot.slane %v59, %v157
    %v163 = vmul.f32 %v141, %v146
    %v164 = vmul.f32 %v140, %v150
    %v165 = vmul.f32 %v139, %v154
    %v166 = vmul.f32 %v138, %v158
    %167 = vrot.lane.b32.xlu0 %v123, 16
    %v168 = vpop.permute.xlu0 %167
    %169 = vrot.lane.b32.xlu0 %v124, 16
    %v170 = vpop.permute.xlu0 %169
    %171 = vrot.lane.b32.xlu0 %v125, 16
    %v172 = vpop.permute.xlu0 %171
    %173 = vrot.lane.b32.xlu0 %v126, 16
    %v174 = vpop.permute.xlu0 %173
    %vm175 = vcmp.lt.s32.totalorder %v136, 16
    %v176 = vsel %vm175, %v172, %v174
    %v177 = vsel %vm175, %v170, %v172
    %v178 = vsel %vm175, %v168, %v170
    %v179 = vsel %vm175, %v174, %v168
    %v181 = vlaneseq
    %v182 = vshrl.u32 %v181, 7
    %v183 = vsub.s32 0, %v182
    %v184 = vrot.slane %v61, %v183
    %v185 = vlaneseq
    %v186 = vshrl.u32 %v185, 7
    %v187 = vsub.s32 1, %v186
    %v188 = vrot.slane %v61, %v187
    %v189 = vlaneseq
    %v190 = vshrl.u32 %v189, 7
    %v191 = vsub.s32 2, %v190
    %v192 = vrot.slane %v61, %v191
    %v193 = vlaneseq
    %v194 = vshrl.u32 %v193, 7
    %v195 = vsub.s32 3, %v194
    %v196 = vrot.slane %v61, %v195
    %v201 = vmul.f32 %v179, %v184
    %v202 = vmul.f32 %v178, %v188
    %v203 = vmul.f32 %v177, %v192
    %v204 = vmul.f32 %v176, %v196
    %205 = vrot.lane.b32.xlu0 %v123, 15
    %v206 = vpop.permute.xlu0 %205
    %207 = vrot.lane.b32.xlu0 %v124, 15
    %v208 = vpop.permute.xlu0 %207
    %209 = vrot.lane.b32.xlu0 %v125, 15
    %v210 = vpop.permute.xlu0 %209
    %211 = vrot.lane.b32.xlu0 %v126, 15
    %v212 = vpop.permute.xlu0 %211
    %vm213 = vcmp.lt.s32.totalorder %v136, 15
    %v214 = vsel %vm213, %v210, %v212
    %v215 = vsel %vm213, %v208, %v210
    %v216 = vsel %vm213, %v206, %v208
    %v217 = vsel %vm213, %v212, %v206
    %v219 = vlaneseq
    %v220 = vshrl.u32 %v219, 7
    %v221 = vsub.s32 0, %v220
    %v222 = vrot.slane %v63, %v221
    %v223 = vlaneseq
    %v224 = vshrl.u32 %v223, 7
    %v225 = vsub.s32 1, %v224
    %v226 = vrot.slane %v63, %v225
    %v227 = vlaneseq
    %v228 = vshrl.u32 %v227, 7
    %v229 = vsub.s32 2, %v228
    %v230 = vrot.slane %v63, %v229
    %v231 = vlaneseq
    %v232 = vshrl.u32 %v231, 7
    %v233 = vsub.s32 3, %v232
    %v234 = vrot.slane %v63, %v233
    %v239 = vmul.f32 %v217, %v222
    %v240 = vmul.f32 %v216, %v226
    %v241 = vmul.f32 %v215, %v230
    %v242 = vmul.f32 %v214, %v234
    %243 = vrot.lane.b32.xlu0 %v123, 1
    %v244 = vpop.permute.xlu0 %243
    %245 = vrot.lane.b32.xlu0 %v124, 1
    %v246 = vpop.permute.xlu0 %245
    %247 = vrot.lane.b32.xlu0 %v125, 1
    %v248 = vpop.permute.xlu0 %247
    %249 = vrot.lane.b32.xlu0 %v126, 1
    %v250 = vpop.permute.xlu0 %249
    %vm251 = vcmp.lt.s32.totalorder %v136, 1
    %v252 = vsel %vm251, %v248, %v250
    %v253 = vsel %vm251, %v246, %v248
    %v254 = vsel %vm251, %v244, %v246
    %v255 = vsel %vm251, %v250, %v244
    %v257 = vlaneseq
    %v258 = vshrl.u32 %v257, 7
    %v259 = vsub.s32 0, %v258
    %v260 = vrot.slane %v65, %v259
    %v261 = vlaneseq
    %v262 = vshrl.u32 %v261, 7
    %v263 = vsub.s32 1, %v262
    %v264 = vrot.slane %v65, %v263
    %v265 = vlaneseq
    %v266 = vshrl.u32 %v265, 7
    %v267 = vsub.s32 2, %v266
    %v268 = vrot.slane %v65, %v267
    %v269 = vlaneseq
    %v270 = vshrl.u32 %v269, 7
    %v271 = vsub.s32 3, %v270
    %v272 = vrot.slane %v65, %v271
    %v277 = vmul.f32 %v255, %v260
    %v278 = vmul.f32 %v254, %v264
    %v279 = vmul.f32 %v253, %v268
    %v280 = vmul.f32 %v252, %v272
    %v282 = vlaneseq
    %v283 = vshrl.u32 %v282, 7
    %v284 = vsub.s32 0, %v283
    %v285 = vrot.slane %v67, %v284
    %v286 = vlaneseq
    %v287 = vshrl.u32 %v286, 7
    %v288 = vsub.s32 1, %v287
    %v289 = vrot.slane %v67, %v288
    %v290 = vlaneseq
    %v291 = vshrl.u32 %v290, 7
    %v292 = vsub.s32 2, %v291
    %v293 = vrot.slane %v67, %v292
    %v294 = vlaneseq
    %v295 = vshrl.u32 %v294, 7
    %v296 = vsub.s32 3, %v295
    %v297 = vrot.slane %v67, %v296
    %v302 = vmul.f32 %v123, %v285
    %v303 = vmul.f32 %v124, %v289
    %v304 = vmul.f32 %v125, %v293
    %v305 = vmul.f32 %v126, %v297
    %306 = vrot.lane.b32.xlu0 %v123, 127
    %v307 = vpop.permute.xlu0 %306
    %308 = vrot.lane.b32.xlu0 %v124, 127
    %v309 = vpop.permute.xlu0 %308
    %310 = vrot.lane.b32.xlu0 %v125, 127
    %v311 = vpop.permute.xlu0 %310
    %312 = vrot.lane.b32.xlu0 %v126, 127
    %v313 = vpop.permute.xlu0 %312
    %vm314 = vcmp.lt.s32.totalorder %v136, 127
    %v315 = vsel %vm314, %v311, %v313
    %v316 = vsel %vm314, %v309, %v311
    %v317 = vsel %vm314, %v307, %v309
    %v318 = vsel %vm314, %v313, %v307
    %v320 = vlaneseq
    %v321 = vshrl.u32 %v320, 7
    %v322 = vsub.s32 0, %v321
    %v323 = vrot.slane %v69, %v322
    %v324 = vlaneseq
    %v325 = vshrl.u32 %v324, 7
    %v326 = vsub.s32 1, %v325
    %v327 = vrot.slane %v69, %v326
    %v328 = vlaneseq
    %v329 = vshrl.u32 %v328, 7
    %v330 = vsub.s32 2, %v329
    %v331 = vrot.slane %v69, %v330
    %v332 = vlaneseq
    %v333 = vshrl.u32 %v332, 7
    %v334 = vsub.s32 3, %v333
    %v335 = vrot.slane %v69, %v334
    %v340 = vmul.f32 %v317, %v323
    %v341 = vmul.f32 %v316, %v327
    %v342 = vmul.f32 %v315, %v331
    %v343 = vmul.f32 %v318, %v335
    %344 = vrot.lane.b32.xlu0 %v123, 113
    %v345 = vpop.permute.xlu0 %344
    %346 = vrot.lane.b32.xlu0 %v124, 113
    %v347 = vpop.permute.xlu0 %346
    %348 = vrot.lane.b32.xlu0 %v125, 113
    %v349 = vpop.permute.xlu0 %348
    %350 = vrot.lane.b32.xlu0 %v126, 113
    %v351 = vpop.permute.xlu0 %350
    %vm352 = vcmp.lt.s32.totalorder %v136, 113
    %v353 = vsel %vm352, %v349, %v351
    %v354 = vsel %vm352, %v347, %v349
    %v355 = vsel %vm352, %v345, %v347
    %v356 = vsel %vm352, %v351, %v345
    %v358 = vlaneseq
    %v359 = vshrl.u32 %v358, 7
    %v360 = vsub.s32 0, %v359
    %v361 = vrot.slane %v71, %v360
    %v362 = vlaneseq
    %v363 = vshrl.u32 %v362, 7
    %v364 = vsub.s32 1, %v363
    %v365 = vrot.slane %v71, %v364
    %v366 = vlaneseq
    %v367 = vshrl.u32 %v366, 7
    %v368 = vsub.s32 2, %v367
    %v369 = vrot.slane %v71, %v368
    %v370 = vlaneseq
    %v371 = vshrl.u32 %v370, 7
    %v372 = vsub.s32 3, %v371
    %v373 = vrot.slane %v71, %v372
    %v378 = vmul.f32 %v355, %v361
    %v379 = vmul.f32 %v354, %v365
    %v380 = vmul.f32 %v353, %v369
    %v381 = vmul.f32 %v356, %v373
    %382 = vrot.lane.b32.xlu0 %v123, 112
    %v383 = vpop.permute.xlu0 %382
    %384 = vrot.lane.b32.xlu0 %v124, 112
    %v385 = vpop.permute.xlu0 %384
    %386 = vrot.lane.b32.xlu0 %v125, 112
    %v387 = vpop.permute.xlu0 %386
    %388 = vrot.lane.b32.xlu0 %v126, 112
    %v389 = vpop.permute.xlu0 %388
    %vm390 = vcmp.lt.s32.totalorder %v136, 112
    %v391 = vsel %vm390, %v387, %v389
    %v392 = vsel %vm390, %v385, %v387
    %v393 = vsel %vm390, %v383, %v385
    %v394 = vsel %vm390, %v389, %v383
    %v396 = vlaneseq
    %v397 = vshrl.u32 %v396, 7
    %v398 = vsub.s32 0, %v397
    %v399 = vrot.slane %v73, %v398
    %v400 = vlaneseq
    %v401 = vshrl.u32 %v400, 7
    %v402 = vsub.s32 1, %v401
    %v403 = vrot.slane %v73, %v402
    %v404 = vlaneseq
    %v405 = vshrl.u32 %v404, 7
    %v406 = vsub.s32 2, %v405
    %v407 = vrot.slane %v73, %v406
    %v408 = vlaneseq
    %v409 = vshrl.u32 %v408, 7
    %v410 = vsub.s32 3, %v409
    %v411 = vrot.slane %v73, %v410
    %v416 = vmul.f32 %v393, %v399
    %v417 = vmul.f32 %v392, %v403
    %v418 = vmul.f32 %v391, %v407
    %v419 = vmul.f32 %v394, %v411
    %420 = vrot.lane.b32.xlu0 %v123, 111
    %v421 = vpop.permute.xlu0 %420
    %422 = vrot.lane.b32.xlu0 %v124, 111
    %v423 = vpop.permute.xlu0 %422
    %424 = vrot.lane.b32.xlu0 %v125, 111
    %v425 = vpop.permute.xlu0 %424
    %426 = vrot.lane.b32.xlu0 %v126, 111
    %v427 = vpop.permute.xlu0 %426
    %vm428 = vcmp.lt.s32.totalorder %v136, 111
    %v429 = vsel %vm428, %v425, %v427
    %v430 = vsel %vm428, %v423, %v425
    %v431 = vsel %vm428, %v421, %v423
    %v432 = vsel %vm428, %v427, %v421
    %v434 = vlaneseq
    %v435 = vshrl.u32 %v434, 7
    %v436 = vsub.s32 0, %v435
    %v437 = vrot.slane %v75, %v436
    %v438 = vlaneseq
    %v439 = vshrl.u32 %v438, 7
    %v440 = vsub.s32 1, %v439
    %v441 = vrot.slane %v75, %v440
    %v442 = vlaneseq
    %v443 = vshrl.u32 %v442, 7
    %v444 = vsub.s32 2, %v443
    %v445 = vrot.slane %v75, %v444
    %v446 = vlaneseq
    %v447 = vshrl.u32 %v446, 7
    %v448 = vsub.s32 3, %v447
    %v449 = vrot.slane %v75, %v448
    %v454 = vmul.f32 %v431, %v437
    %v455 = vmul.f32 %v430, %v441
    %v456 = vmul.f32 %v429, %v445
    %v457 = vmul.f32 %v432, %v449
    %v458 = vld [vmem:[%s2] sm:$0xff]
    %460 = vset.pattern.permute.xlu0 0
    %461 = vperm.xlu0 %460, %v458
    %v462 = vpop.permute.xlu0 %461
    %vm464 = vcmask 588800
    %v466 = vsel %vm464, %v58, 0
    %468 = vmatprep.subr.mxu0 %v164
    %469 = vmatpush1.msra.mxu0 %v163
    %470 = vmatprep.subr.mxu0 %v202
    %471 = vmatpush1.msra.mxu0 %v201
    %472 = vmatprep.subr.mxu0 %v240
    %473 = vmatpush1.msra.mxu0 %v239
    %474 = vmatprep.subr.mxu0 %v278
    %475 = vmatpush1.msra.mxu0 %v277
    %476 = vmatprep.subr.mxu0 %v303
    %477 = vmatpush1.msra.mxu0 %v302
    %478 = vmatprep.subr.mxu0 %v341
    %479 = vmatpush1.msra.mxu0 %v340
    %480 = vmatprep.subr.mxu0 %v379
    %481 = vmatpush1.msra.mxu0 %v378
    %482 = vmatprep.subr.mxu0 %v417
    %483 = vmatpush1.msra.mxu0 %v416
    %484 = vmatprep.subr.mxu0 %v455
    %485 = vmatpush1.msra.mxu0 %v454
    %486 = vmatprep.subr.mxu0 0.0
    %487 = vmatpush1.msra.mxu0 0.0
    %488 = vmatprep.subr.mxu0 0.0
    %489 = vmatpush1.msra.mxu0 0.0
    %490 = vmatprep.subr.mxu0 0.0
    %491 = vmatpush1.msra.mxu0 0.0
    %492 = vmatprep.subr.mxu0 0.0
    %493 = vmatpush1.msra.mxu0 0.0
    %494 = vmatprep.subr.mxu0 0.0
    %495 = vmatpush1.msra.mxu0 0.0
    %496 = vmatprep.subr.mxu0 0.0
    %497 = vmatpush1.msra.mxu0 0.0
    %498 = vmatprep.subr.mxu0 0.0
    %499 = vmatpush1.msra.mxu0 0.0
    %500 = vmatprep.subr.mxu0 0.0
    %501 = vmatpush1.msra.mxu0 0.0
    %502 = vmatprep.subr.mxu0 0.0
    %503 = vmatpush1.msra.mxu0 0.0
    %504 = vmatprep.subr.mxu0 0.0
    %505 = vmatpush1.msra.mxu0 0.0
    %506 = vmatprep.subr.mxu0 0.0
    %507 = vmatpush1.msra.mxu0 0.0
    %508 = vmatprep.subr.mxu0 0.0
    %509 = vmatpush1.msra.mxu0 0.0
    %510 = vmatprep.subr.mxu0 0.0
    %511 = vmatpush1.msra.mxu0 0.0
    %512 = vmatprep.subr.mxu0 0.0
    %513 = vmatpush1.msra.mxu0 0.0
    %514 = vmatprep.subr.mxu0 0.0
    %515 = vmatpush1.msra.mxu0 0.0
    %516 = vmatprep.subr.mxu0 0.0
    %517 = vmatpush1.msra.mxu0 0.0
    %518 = vmatprep.subr.mxu0 0.0
    %519 = vmatpush1.msra.mxu0 0.0
    %520 = vmatprep.subr.mxu0 0.0
    %521 = vmatpush1.msra.mxu0 0.0
    %522 = vmatprep.subr.mxu0 0.0
    %523 = vmatpush1.msra.mxu0 0.0
    %524 = vmatprep.subr.mxu0 0.0
    %525 = vmatpush1.msra.mxu0 0.0
    %526 = vmatprep.subr.mxu0 0.0
    %527 = vmatpush1.msra.mxu0 0.0
    %528 = vmatprep.subr.mxu0 0.0
    %529 = vmatpush1.msra.mxu0 0.0
    %530 = vmatprep.subr.mxu0 0.0
    %531 = vmatpush1.msra.mxu0 0.0
    %532 = vmatprep.mubr.f32.mxu0 0.0
    %533 = vmatmul.mubr.f32.gmra.mrb[0].mxu0 %v466
    %v534 = vpop.f32.mrb[0].mxu0
    %v535 = vadd.f32 %v462, %v534
    %v536 = vpop.f32.mrb[0].mxu0
    %v537 = vadd.f32 %v462, %v536
    %538 = vdwg.mxu0
    %539 = vmatprep.subr.mxu0 %v166
    %540 = vmatpush1.msra.mxu0 %v165
    %541 = vmatprep.subr.mxu0 %v204
    %542 = vmatpush1.msra.mxu0 %v203
    %543 = vmatprep.subr.mxu0 %v242
    %544 = vmatpush1.msra.mxu0 %v241
    %545 = vmatprep.subr.mxu0 %v280
    %546 = vmatpush1.msra.mxu0 %v279
    %547 = vmatprep.subr.mxu0 %v305
    %548 = vmatpush1.msra.mxu0 %v304
    %549 = vmatprep.subr.mxu0 %v343
    %550 = vmatpush1.msra.mxu0 %v342
    %551 = vmatprep.subr.mxu0 %v381
    %552 = vmatpush1.msra.mxu0 %v380
    %553 = vmatprep.subr.mxu0 %v419
    %554 = vmatpush1.msra.mxu0 %v418
    %555 = vmatprep.subr.mxu0 %v457
    %556 = vmatpush1.msra.mxu0 %v456
    %557 = vmatprep.subr.mxu0 0.0
    %558 = vmatpush1.msra.mxu0 0.0
    %559 = vmatprep.subr.mxu0 0.0
    %560 = vmatpush1.msra.mxu0 0.0
    %561 = vmatprep.subr.mxu0 0.0
    %562 = vmatpush1.msra.mxu0 0.0
    %563 = vmatprep.subr.mxu0 0.0
    %564 = vmatpush1.msra.mxu0 0.0
    %565 = vmatprep.subr.mxu0 0.0
    %566 = vmatpush1.msra.mxu0 0.0
    %567 = vmatprep.subr.mxu0 0.0
    %568 = vmatpush1.msra.mxu0 0.0
    %569 = vmatprep.subr.mxu0 0.0
    %570 = vmatpush1.msra.mxu0 0.0
    %571 = vmatprep.subr.mxu0 0.0
    %572 = vmatpush1.msra.mxu0 0.0
    %573 = vmatprep.subr.mxu0 0.0
    %574 = vmatpush1.msra.mxu0 0.0
    %575 = vmatprep.subr.mxu0 0.0
    %576 = vmatpush1.msra.mxu0 0.0
    %577 = vmatprep.subr.mxu0 0.0
    %578 = vmatpush1.msra.mxu0 0.0
    %579 = vmatprep.subr.mxu0 0.0
    %580 = vmatpush1.msra.mxu0 0.0
    %581 = vmatprep.subr.mxu0 0.0
    %582 = vmatpush1.msra.mxu0 0.0
    %583 = vmatprep.subr.mxu0 0.0
    %584 = vmatpush1.msra.mxu0 0.0
    %585 = vmatprep.subr.mxu0 0.0
    %586 = vmatpush1.msra.mxu0 0.0
    %587 = vmatprep.subr.mxu0 0.0
    %588 = vmatpush1.msra.mxu0 0.0
    %589 = vmatprep.subr.mxu0 0.0
    %590 = vmatpush1.msra.mxu0 0.0
    %591 = vmatprep.subr.mxu0 0.0
    %592 = vmatpush1.msra.mxu0 0.0
    %593 = vmatprep.subr.mxu0 0.0
    %594 = vmatpush1.msra.mxu0 0.0
    %595 = vmatprep.subr.mxu0 0.0
    %596 = vmatpush1.msra.mxu0 0.0
    %597 = vmatprep.subr.mxu0 0.0
    %598 = vmatpush1.msra.mxu0 0.0
    %599 = vmatprep.subr.mxu0 0.0
    %600 = vmatpush1.msra.mxu0 0.0
    %601 = vmatprep.subr.mxu0 0.0
    %602 = vmatpush1.msra.mxu0 0.0
    %603 = vmatprep.mubr.f32.mxu0 0.0
    %604 = vmatmul.mubr.f32.gmra.mrb[0].mxu0 %v466
    %v605 = vpop.f32.mrb[0].mxu0
    %v606 = vadd.f32 %v462, %v605
    %v607 = vpop.f32.mrb[0].mxu0
    %v608 = vadd.f32 %v462, %v607
    %609 = vdwg.mxu0
    %610 = vrot.lane.b32.xlu0 %v535, 17
    %v611 = vpop.permute.xlu0 %610
    %612 = vrot.lane.b32.xlu0 %v537, 17
    %v613 = vpop.permute.xlu0 %612
    %614 = vrot.lane.b32.xlu0 %v606, 17
    %v615 = vpop.permute.xlu0 %614
    %616 = vrot.lane.b32.xlu0 %v608, 17
    %v617 = vpop.permute.xlu0 %616
    %v618 = vsel %vm137, %v615, %v617
    %v619 = vsel %vm137, %v613, %v615
    %v620 = vsel %vm137, %v611, %v613
    %v621 = vsel %vm137, %v617, %v611
    %v622 = vmul.f32 %v621, %v146
    %v623 = vmul.f32 %v620, %v150
    %v624 = vmul.f32 %v619, %v154
    %v625 = vmul.f32 %v618, %v158
    %626 = vrot.lane.b32.xlu0 %v535, 16
    %v627 = vpop.permute.xlu0 %626
    %628 = vrot.lane.b32.xlu0 %v537, 16
    %v629 = vpop.permute.xlu0 %628
    %630 = vrot.lane.b32.xlu0 %v606, 16
    %v631 = vpop.permute.xlu0 %630
    %632 = vrot.lane.b32.xlu0 %v608, 16
    %v633 = vpop.permute.xlu0 %632
    %v634 = vsel %vm175, %v631, %v633
    %v635 = vsel %vm175, %v629, %v631
    %v636 = vsel %vm175, %v627, %v629
    %v637 = vsel %vm175, %v633, %v627
    %v638 = vmul.f32 %v637, %v184
    %v639 = vmul.f32 %v636, %v188
    %v640 = vmul.f32 %v635, %v192
    %v641 = vmul.f32 %v634, %v196
    %642 = vrot.lane.b32.xlu0 %v535, 15
    %v643 = vpop.permute.xlu0 %642
    %644 = vrot.lane.b32.xlu0 %v537, 15
    %v645 = vpop.permute.xlu0 %644
    %646 = vrot.lane.b32.xlu0 %v606, 15
    %v647 = vpop.permute.xlu0 %646
    %648 = vrot.lane.b32.xlu0 %v608, 15
    %v649 = vpop.permute.xlu0 %648
    %v650 = vsel %vm213, %v647, %v649
    %v651 = vsel %vm213, %v645, %v647
    %v652 = vsel %vm213, %v643, %v645
    %v653 = vsel %vm213, %v649, %v643
    %v654 = vmul.f32 %v653, %v222
    %v655 = vmul.f32 %v652, %v226
    %v656 = vmul.f32 %v651, %v230
    %v657 = vmul.f32 %v650, %v234
    %658 = vrot.lane.b32.xlu0 %v535, 1
    %v659 = vpop.permute.xlu0 %658
    %660 = vrot.lane.b32.xlu0 %v537, 1
    %v661 = vpop.permute.xlu0 %660
    %662 = vrot.lane.b32.xlu0 %v606, 1
    %v663 = vpop.permute.xlu0 %662
    %664 = vrot.lane.b32.xlu0 %v608, 1
    %v665 = vpop.permute.xlu0 %664
    %v666 = vsel %vm251, %v663, %v665
    %v667 = vsel %vm251, %v661, %v663
    %v668 = vsel %vm251, %v659, %v661
    %v669 = vsel %vm251, %v665, %v659
    %v670 = vmul.f32 %v669, %v260
    %v671 = vmul.f32 %v668, %v264
    %v672 = vmul.f32 %v667, %v268
    %v673 = vmul.f32 %v666, %v272
    %v674 = vmul.f32 %v535, %v285
    %v675 = vmul.f32 %v537, %v289
    %v676 = vmul.f32 %v606, %v293
    %v677 = vmul.f32 %v608, %v297
    %678 = vrot.lane.b32.xlu0 %v535, 127
    %v679 = vpop.permute.xlu0 %678
    %680 = vrot.lane.b32.xlu0 %v537, 127
    %v681 = vpop.permute.xlu0 %680
    %682 = vrot.lane.b32.xlu0 %v606, 127
    %v683 = vpop.permute.xlu0 %682
    %684 = vrot.lane.b32.xlu0 %v608, 127
    %v685 = vpop.permute.xlu0 %684
    %v686 = vsel %vm314, %v683, %v685
    %v687 = vsel %vm314, %v681, %v683
    %v688 = vsel %vm314, %v679, %v681
    %v689 = vsel %vm314, %v685, %v679
    %v690 = vmul.f32 %v688, %v323
    %v691 = vmul.f32 %v687, %v327
    %v692 = vmul.f32 %v686, %v331
    %v693 = vmul.f32 %v689, %v335
    %694 = vrot.lane.b32.xlu0 %v535, 113
    %v695 = vpop.permute.xlu0 %694
    %696 = vrot.lane.b32.xlu0 %v537, 113
    %v697 = vpop.permute.xlu0 %696
    %698 = vrot.lane.b32.xlu0 %v606, 113
    %v699 = vpop.permute.xlu0 %698
    %700 = vrot.lane.b32.xlu0 %v608, 113
    %v701 = vpop.permute.xlu0 %700
    %v702 = vsel %vm352, %v699, %v701
    %v703 = vsel %vm352, %v697, %v699
    %v704 = vsel %vm352, %v695, %v697
    %v705 = vsel %vm352, %v701, %v695
    %v706 = vmul.f32 %v704, %v361
    %v707 = vmul.f32 %v703, %v365
    %v708 = vmul.f32 %v702, %v369
    %v709 = vmul.f32 %v705, %v373
    %710 = vrot.lane.b32.xlu0 %v535, 112
    %v711 = vpop.permute.xlu0 %710
    %712 = vrot.lane.b32.xlu0 %v537, 112
    %v713 = vpop.permute.xlu0 %712
    %714 = vrot.lane.b32.xlu0 %v606, 112
    %v715 = vpop.permute.xlu0 %714
    %716 = vrot.lane.b32.xlu0 %v608, 112
    %v717 = vpop.permute.xlu0 %716
    %v718 = vsel %vm390, %v715, %v717
    %v719 = vsel %vm390, %v713, %v715
    %v720 = vsel %vm390, %v711, %v713
    %v721 = vsel %vm390, %v717, %v711
    %v722 = vmul.f32 %v720, %v399
    %v723 = vmul.f32 %v719, %v403
    %v724 = vmul.f32 %v718, %v407
    %v725 = vmul.f32 %v721, %v411
    %726 = vrot.lane.b32.xlu0 %v535, 111
    %v727 = vpop.permute.xlu0 %726
    %728 = vrot.lane.b32.xlu0 %v537, 111
    %v729 = vpop.permute.xlu0 %728
    %730 = vrot.lane.b32.xlu0 %v606, 111
    %v731 = vpop.permute.xlu0 %730
    %732 = vrot.lane.b32.xlu0 %v608, 111
    %v733 = vpop.permute.xlu0 %732
    %v734 = vsel %vm428, %v731, %v733
    %v735 = vsel %vm428, %v729, %v731
    %v736 = vsel %vm428, %v727, %v729
    %v737 = vsel %vm428, %v733, %v727
    %v738 = vmul.f32 %v736, %v437
    %v739 = vmul.f32 %v735, %v441
    %v740 = vmul.f32 %v734, %v445
    %v741 = vmul.f32 %v737, %v449
    %742 = vmatprep.subr.mxu0 %v623
    %743 = vmatpush1.msra.mxu0 %v622
    %744 = vmatprep.subr.mxu0 %v639
    %745 = vmatpush1.msra.mxu0 %v638
    %746 = vmatprep.subr.mxu0 %v655
    %747 = vmatpush1.msra.mxu0 %v654
    %748 = vmatprep.subr.mxu0 %v671
    %749 = vmatpush1.msra.mxu0 %v670
    %750 = vmatprep.subr.mxu0 %v675
    %751 = vmatpush1.msra.mxu0 %v674
    %752 = vmatprep.subr.mxu0 %v691
    %753 = vmatpush1.msra.mxu0 %v690
    %754 = vmatprep.subr.mxu0 %v707
    %755 = vmatpush1.msra.mxu0 %v706
    %756 = vmatprep.subr.mxu0 %v723
    %757 = vmatpush1.msra.mxu0 %v722
    %758 = vmatprep.subr.mxu0 %v739
    %759 = vmatpush1.msra.mxu0 %v738
    %760 = vmatprep.subr.mxu0 0.0
    %761 = vmatpush1.msra.mxu0 0.0
    %762 = vmatprep.subr.mxu0 0.0
    %763 = vmatpush1.msra.mxu0 0.0
    %764 = vmatprep.subr.mxu0 0.0
    %765 = vmatpush1.msra.mxu0 0.0
    %766 = vmatprep.subr.mxu0 0.0
    %767 = vmatpush1.msra.mxu0 0.0
    %768 = vmatprep.subr.mxu0 0.0
    %769 = vmatpush1.msra.mxu0 0.0
    %770 = vmatprep.subr.mxu0 0.0
    %771 = vmatpush1.msra.mxu0 0.0
    %772 = vmatprep.subr.mxu0 0.0
    %773 = vmatpush1.msra.mxu0 0.0
    %774 = vmatprep.subr.mxu0 0.0
    %775 = vmatpush1.msra.mxu0 0.0
    %776 = vmatprep.subr.mxu0 0.0
    %777 = vmatpush1.msra.mxu0 0.0
    %778 = vmatprep.subr.mxu0 0.0
    %779 = vmatpush1.msra.mxu0 0.0
    %780 = vmatprep.subr.mxu0 0.0
    %781 = vmatpush1.msra.mxu0 0.0
    %782 = vmatprep.subr.mxu0 0.0
    %783 = vmatpush1.msra.mxu0 0.0
    %784 = vmatprep.subr.mxu0 0.0
    %785 = vmatpush1.msra.mxu0 0.0
    %786 = vmatprep.subr.mxu0 0.0
    %787 = vmatpush1.msra.mxu0 0.0
    %788 = vmatprep.subr.mxu0 0.0
    %789 = vmatpush1.msra.mxu0 0.0
    %790 = vmatprep.subr.mxu0 0.0
    %791 = vmatpush1.msra.mxu0 0.0
    %792 = vmatprep.subr.mxu0 0.0
    %793 = vmatpush1.msra.mxu0 0.0
    %794 = vmatprep.subr.mxu0 0.0
    %795 = vmatpush1.msra.mxu0 0.0
    %796 = vmatprep.subr.mxu0 0.0
    %797 = vmatpush1.msra.mxu0 0.0
    %798 = vmatprep.subr.mxu0 0.0
    %799 = vmatpush1.msra.mxu0 0.0
    %800 = vmatprep.subr.mxu0 0.0
    %801 = vmatpush1.msra.mxu0 0.0
    %802 = vmatprep.subr.mxu0 0.0
    %803 = vmatpush1.msra.mxu0 0.0
    %804 = vmatprep.subr.mxu0 0.0
    %805 = vmatpush1.msra.mxu0 0.0
    %806 = vmatprep.mubr.f32.mxu0 0.0
    %807 = vmatmul.mubr.f32.gmra.mrb[0].mxu0 %v466
    %v808 = vpop.f32.mrb[0].mxu0
    %v809 = vadd.f32 %v462, %v808
    %v810 = vpop.f32.mrb[0].mxu0
    %v811 = vadd.f32 %v462, %v810
    %812 = vdwg.mxu0
    %813 = vmatprep.subr.mxu0 %v625
    %814 = vmatpush1.msra.mxu0 %v624
    %815 = vmatprep.subr.mxu0 %v641
    %816 = vmatpush1.msra.mxu0 %v640
    %817 = vmatprep.subr.mxu0 %v657
    %818 = vmatpush1.msra.mxu0 %v656
    %819 = vmatprep.subr.mxu0 %v673
    %820 = vmatpush1.msra.mxu0 %v672
    %821 = vmatprep.subr.mxu0 %v677
    %822 = vmatpush1.msra.mxu0 %v676
    %823 = vmatprep.subr.mxu0 %v693
    %824 = vmatpush1.msra.mxu0 %v692
    %825 = vmatprep.subr.mxu0 %v709
    %826 = vmatpush1.msra.mxu0 %v708
    %827 = vmatprep.subr.mxu0 %v725
    %828 = vmatpush1.msra.mxu0 %v724
    %829 = vmatprep.subr.mxu0 %v741
    %830 = vmatpush1.msra.mxu0 %v740
    %831 = vmatprep.subr.mxu0 0.0
    %832 = vmatpush1.msra.mxu0 0.0
    %833 = vmatprep.subr.mxu0 0.0
    %834 = vmatpush1.msra.mxu0 0.0
    %835 = vmatprep.subr.mxu0 0.0
    %836 = vmatpush1.msra.mxu0 0.0
    %837 = vmatprep.subr.mxu0 0.0
    %838 = vmatpush1.msra.mxu0 0.0
    %839 = vmatprep.subr.mxu0 0.0
    %840 = vmatpush1.msra.mxu0 0.0
    %841 = vmatprep.subr.mxu0 0.0
    %842 = vmatpush1.msra.mxu0 0.0
    %843 = vmatprep.subr.mxu0 0.0
    %844 = vmatpush1.msra.mxu0 0.0
    %845 = vmatprep.subr.mxu0 0.0
    %846 = vmatpush1.msra.mxu0 0.0
    %847 = vmatprep.subr.mxu0 0.0
    %848 = vmatpush1.msra.mxu0 0.0
    %849 = vmatprep.subr.mxu0 0.0
    %850 = vmatpush1.msra.mxu0 0.0
    %851 = vmatprep.subr.mxu0 0.0
    %852 = vmatpush1.msra.mxu0 0.0
    %853 = vmatprep.subr.mxu0 0.0
    %854 = vmatpush1.msra.mxu0 0.0
    %855 = vmatprep.subr.mxu0 0.0
    %856 = vmatpush1.msra.mxu0 0.0
    %857 = vmatprep.subr.mxu0 0.0
    %858 = vmatpush1.msra.mxu0 0.0
    %859 = vmatprep.subr.mxu0 0.0
    %860 = vmatpush1.msra.mxu0 0.0
    %861 = vmatprep.subr.mxu0 0.0
    %862 = vmatpush1.msra.mxu0 0.0
    %863 = vmatprep.subr.mxu0 0.0
    %864 = vmatpush1.msra.mxu0 0.0
    %865 = vmatprep.subr.mxu0 0.0
    %866 = vmatpush1.msra.mxu0 0.0
    %867 = vmatprep.subr.mxu0 0.0
    %868 = vmatpush1.msra.mxu0 0.0
    %869 = vmatprep.subr.mxu0 0.0
    %870 = vmatpush1.msra.mxu0 0.0
    %871 = vmatprep.subr.mxu0 0.0
    %872 = vmatpush1.msra.mxu0 0.0
    %873 = vmatprep.subr.mxu0 0.0
    %874 = vmatpush1.msra.mxu0 0.0
    %875 = vmatprep.subr.mxu0 0.0
    %876 = vmatpush1.msra.mxu0 0.0
    %877 = vmatprep.mubr.f32.mxu0 0.0
    %878 = vmatmul.mubr.f32.gmra.mrb[0].mxu0 %v466
    %v879 = vpop.f32.mrb[0].mxu0
    %v880 = vadd.f32 %v462, %v879
    %v881 = vpop.f32.mrb[0].mxu0
    %v882 = vadd.f32 %v462, %v881
    %883 = vdwg.mxu0
    %v884 = vmax.f32 %v809, 0.0
    %v885 = vmax.f32 %v811, 0.0
    %v886 = vmax.f32 %v880, 0.0
    %v887 = vmax.f32 %v882, 0.0
    %v888 = vadd.f32 %v884, %v885
    %v889 = vadd.f32 %v888, %v886
    %v890 = vadd.f32 %v889, %v887
    %891 = vadd.xlane.f32.xlu0 %v890
    %v892 = vpop.xlane.xlu0 %891
    %v893 = vmul.f32 %v892, %v85
    %v894 = vsub.f32 %v884, %v893
    %v895 = vsub.f32 %v885, %v893
    %v896 = vsub.f32 %v886, %v893
    %v897 = vsub.f32 %v887, %v893
    %v898 = vmul.f32 %v894, %v894
    %v899 = vmul.f32 %v895, %v895
    %v900 = vmul.f32 %v896, %v896
    %v901 = vmul.f32 %v897, %v897
    %v902 = vadd.f32 %v898, %v899
    %v903 = vadd.f32 %v902, %v900
    %v904 = vadd.f32 %v903, %v901
    %905 = vadd.xlane.f32.xlu0 %v904
    %v906 = vpop.xlane.xlu0 %905
    %v907 = vmul.f32 %v906, %v85
    %v908 = vmul.f32 %v105, %v894
    %v909 = vmul.f32 %v105, %v895
    %v910 = vmul.f32 %v105, %v896
    %v911 = vmul.f32 %v105, %v897
    %v912 = vadd.f32 %v907, 1e-05
    %v913 = vrsqrt.pop %v912
    %v914 = vmul.f32 %v908, %v913
    %v915 = vmul.f32 %v909, %v913
    %v916 = vmul.f32 %v910, %v913
    %v917 = vmul.f32 %v911, %v913
    %v918 = vadd.f32 %v914, %v121
    %v919 = vadd.f32 %v915, %v121
    %v920 = vadd.f32 %v916, %v121
    %v921 = vadd.f32 %v917, %v121
    %v922 = vld [vmem:[%s10] sm:$0xff]
    %v923 = vld [vmem:[%s10 + $0x8] sm:$0xff]
    %v924 = vld [vmem:[%s10 + $0x10] sm:$0xff]
    %v925 = vld [vmem:[%s10 + $0x18] sm:$0xff]
    %v926 = vld [vmem:[%s10 + $0x20] sm:$0xff]
    %v927 = vld [vmem:[%s10 + $0x28] sm:$0xff]
    %v928 = vld [vmem:[%s10 + $0x30] sm:$0xff]
    %v929 = vld [vmem:[%s10 + $0x38] sm:$0xff]
    %v930 = vld [vmem:[%s10 + $0x40] sm:$0xff]
    %v931 = vld [vmem:[%s10 + $0x48] sm:$0xff]
    %v932 = vld [vmem:[%s10 + $0x50] sm:$0xff]
    %v933 = vld [vmem:[%s10 + $0x58] sm:$0xff]
    %v934 = vld [vmem:[%s10 + $0x60] sm:$0xff]
    %v935 = vld [vmem:[%s10 + $0x68] sm:$0xff]
    %v936 = vld [vmem:[%s10 + $0x70] sm:$0xff]
    %v937 = vld [vmem:[%s10 + $0x78] sm:$0xff]
    %v938 = vld [vmem:[%s10 + $0x80] sm:$0xff]
    %v939 = vld [vmem:[%s10 + $0x88] sm:$0xff]
    %v940 = vld [vmem:[%s10 + $0x90] sm:$0xff]
    %v941 = vld [vmem:[%s10 + $0x98] sm:$0xff]
    %v942 = vld [vmem:[%s10 + $0xa0] sm:$0xff]
    %v943 = vld [vmem:[%s10 + $0xa8] sm:$0xff]
    %v944 = vld [vmem:[%s10 + $0xb0] sm:$0xff]
    %v945 = vld [vmem:[%s10 + $0xb8] sm:$0xff]
    %v946 = vld [vmem:[%s10 + $0xc0] sm:$0xff]
    %v947 = vld [vmem:[%s10 + $0xc8] sm:$0xff]
    %v948 = vld [vmem:[%s10 + $0xd0] sm:$0xff]
    %v949 = vld [vmem:[%s10 + $0xd8] sm:$0xff]
    %v950 = vld [vmem:[%s10 + $0xe0] sm:$0xff]
    %v951 = vld [vmem:[%s10 + $0xe8] sm:$0xff]
    %v952 = vld [vmem:[%s10 + $0xf0] sm:$0xff]
    %v953 = vld [vmem:[%s10 + $0xf8] sm:$0xff]
    %v954 = vld [vmem:[%s10 + $0x100] sm:$0xff]
    %v955 = vld [vmem:[%s10 + $0x108] sm:$0xff]
    %v956 = vld [vmem:[%s10 + $0x110] sm:$0xff]
    %v957 = vld [vmem:[%s10 + $0x118] sm:$0xff]
    %v958 = vld [vmem:[%s10 + $0x120] sm:$0xff]
    %v959 = vld [vmem:[%s10 + $0x128] sm:$0xff]
    %v960 = vld [vmem:[%s10 + $0x130] sm:$0xff]
    %v961 = vld [vmem:[%s10 + $0x138] sm:$0xff]
    %v962 = vld [vmem:[%s10 + $0x140] sm:$0xff]
    %v963 = vld [vmem:[%s10 + $0x148] sm:$0xff]
    %v964 = vld [vmem:[%s10 + $0x150] sm:$0xff]
    %v965 = vld [vmem:[%s10 + $0x158] sm:$0xff]
    %v966 = vld [vmem:[%s10 + $0x160] sm:$0xff]
    %v967 = vld [vmem:[%s10 + $0x168] sm:$0xff]
    %v968 = vld [vmem:[%s10 + $0x170] sm:$0xff]
    %v969 = vld [vmem:[%s10 + $0x178] sm:$0xff]
    %v970 = vld [vmem:[%s10 + $0x180] sm:$0xff]
    %v971 = vld [vmem:[%s10 + $0x188] sm:$0xff]
    %v972 = vld [vmem:[%s10 + $0x190] sm:$0xff]
    %v973 = vld [vmem:[%s10 + $0x198] sm:$0xff]
    %v974 = vld [vmem:[%s10 + $0x1a0] sm:$0xff]
    %v975 = vld [vmem:[%s10 + $0x1a8] sm:$0xff]
    %v976 = vld [vmem:[%s10 + $0x1b0] sm:$0xff]
    %v977 = vld [vmem:[%s10 + $0x1b8] sm:$0xff]
    %v978 = vld [vmem:[%s10 + $0x1c0] sm:$0xff]
    %v979 = vld [vmem:[%s10 + $0x1c8] sm:$0xff]
    %v980 = vld [vmem:[%s10 + $0x1d0] sm:$0xff]
    %v981 = vld [vmem:[%s10 + $0x1d8] sm:$0xff]
    %v982 = vld [vmem:[%s10 + $0x1e0] sm:$0xff]
    %v983 = vld [vmem:[%s10 + $0x1e8] sm:$0xff]
    %v984 = vld [vmem:[%s10 + $0x1f0] sm:$0xff]
    %v985 = vld [vmem:[%s10 + $0x1f8] sm:$0xff]
    %986 = vmatprep.subr.mxu0 0.0
    %987 = vmatpush1.msra.mxu0 %v922
    %988 = vmatprep.subr.mxu0 0.0
    %989 = vmatpush1.msra.mxu0 %v923
    %990 = vmatprep.subr.mxu0 0.0
    %991 = vmatpush1.msra.mxu0 %v924
    %992 = vmatprep.subr.mxu0 0.0
    %993 = vmatpush1.msra.mxu0 %v925
    %994 = vmatprep.subr.mxu0 0.0
    %995 = vmatpush1.msra.mxu0 %v926
    %996 = vmatprep.subr.mxu0 0.0
    %997 = vmatpush1.msra.mxu0 %v927
    %998 = vmatprep.subr.mxu0 0.0
    %999 = vmatpush1.msra.mxu0 %v928
    %1000 = vmatprep.subr.mxu0 0.0
    %1001 = vmatpush1.msra.mxu0 %v929
    %1002 = vmatprep.subr.mxu0 0.0
    %1003 = vmatpush1.msra.mxu0 %v930
    %1004 = vmatprep.subr.mxu0 0.0
    %1005 = vmatpush1.msra.mxu0 %v931
    %1006 = vmatprep.subr.mxu0 0.0
    %1007 = vmatpush1.msra.mxu0 %v932
    %1008 = vmatprep.subr.mxu0 0.0
    %1009 = vmatpush1.msra.mxu0 %v933
    %1010 = vmatprep.subr.mxu0 0.0
    %1011 = vmatpush1.msra.mxu0 %v934
    %1012 = vmatprep.subr.mxu0 0.0
    %1013 = vmatpush1.msra.mxu0 %v935
    %1014 = vmatprep.subr.mxu0 0.0
    %1015 = vmatpush1.msra.mxu0 %v936
    %1016 = vmatprep.subr.mxu0 0.0
    %1017 = vmatpush1.msra.mxu0 %v937
    %1018 = vmatprep.subr.mxu0 0.0
    %1019 = vmatpush1.msra.mxu0 %v938
    %1020 = vmatprep.subr.mxu0 0.0
    %1021 = vmatpush1.msra.mxu0 %v939
    %1022 = vmatprep.subr.mxu0 0.0
    %1023 = vmatpush1.msra.mxu0 %v940
    %1024 = vmatprep.subr.mxu0 0.0
    %1025 = vmatpush1.msra.mxu0 %v941
    %1026 = vmatprep.subr.mxu0 0.0
    %1027 = vmatpush1.msra.mxu0 %v942
    %1028 = vmatprep.subr.mxu0 0.0
    %1029 = vmatpush1.msra.mxu0 %v943
    %1030 = vmatprep.subr.mxu0 0.0
    %1031 = vmatpush1.msra.mxu0 %v944
    %1032 = vmatprep.subr.mxu0 0.0
    %1033 = vmatpush1.msra.mxu0 %v945
    %1034 = vmatprep.subr.mxu0 0.0
    %1035 = vmatpush1.msra.mxu0 %v946
    %1036 = vmatprep.subr.mxu0 0.0
    %1037 = vmatpush1.msra.mxu0 %v947
    %1038 = vmatprep.subr.mxu0 0.0
    %1039 = vmatpush1.msra.mxu0 %v948
    %1040 = vmatprep.subr.mxu0 0.0
    %1041 = vmatpush1.msra.mxu0 %v949
    %1042 = vmatprep.subr.mxu0 0.0
    %1043 = vmatpush1.msra.mxu0 %v950
    %1044 = vmatprep.subr.mxu0 0.0
    %1045 = vmatpush1.msra.mxu0 %v951
    %1046 = vmatprep.subr.mxu0 0.0
    %1047 = vmatpush1.msra.mxu0 %v952
    %1048 = vmatprep.subr.mxu0 0.0
    %1049 = vmatpush1.msra.mxu0 %v953
    %1050 = vmatprep.mubr.f32.mxu0 %v919
    %1051 = vmatmul.mubr.f32.gmra.mrb[0].mxu0 %v918
    %v1052 = vpop.f32.mrb[0].mxu0
    %v1053 = vadd.f32 0.0, %v1052
    %v1054 = vpop.f32.mrb[0].mxu0
    %1055 = vdwg.mxu0
    %1056 = vmatprep.subr.mxu0 0.0
    %1057 = vmatpush1.msra.mxu0 %v954
    %1058 = vmatprep.subr.mxu0 0.0
    %1059 = vmatpush1.msra.mxu0 %v955
    %1060 = vmatprep.subr.mxu0 0.0
    %1061 = vmatpush1.msra.mxu0 %v956
    %1062 = vmatprep.subr.mxu0 0.0
    %1063 = vmatpush1.msra.mxu0 %v957
    %1064 = vmatprep.subr.mxu0 0.0
    %1065 = vmatpush1.msra.mxu0 %v958
    %1066 = vmatprep.subr.mxu0 0.0
    %1067 = vmatpush1.msra.mxu0 %v959
    %1068 = vmatprep.subr.mxu0 0.0
    %1069 = vmatpush1.msra.mxu0 %v960
    %1070 = vmatprep.subr.mxu0 0.0
    %1071 = vmatpush1.msra.mxu0 %v961
    %1072 = vmatprep.subr.mxu0 0.0
    %1073 = vmatpush1.msra.mxu0 %v962
    %1074 = vmatprep.subr.mxu0 0.0
    %1075 = vmatpush1.msra.mxu0 %v963
    %1076 = vmatprep.subr.mxu0 0.0
    %1077 = vmatpush1.msra.mxu0 %v964
    %1078 = vmatprep.subr.mxu0 0.0
    %1079 = vmatpush1.msra.mxu0 %v965
    %1080 = vmatprep.subr.mxu0 0.0
    %1081 = vmatpush1.msra.mxu0 %v966
    %1082 = vmatprep.subr.mxu0 0.0
    %1083 = vmatpush1.msra.mxu0 %v967
    %1084 = vmatprep.subr.mxu0 0.0
    %1085 = vmatpush1.msra.mxu0 %v968
    %1086 = vmatprep.subr.mxu0 0.0
    %1087 = vmatpush1.msra.mxu0 %v969
    %1088 = vmatprep.subr.mxu0 0.0
    %1089 = vmatpush1.msra.mxu0 %v970
    %1090 = vmatprep.subr.mxu0 0.0
    %1091 = vmatpush1.msra.mxu0 %v971
    %1092 = vmatprep.subr.mxu0 0.0
    %1093 = vmatpush1.msra.mxu0 %v972
    %1094 = vmatprep.subr.mxu0 0.0
    %1095 = vmatpush1.msra.mxu0 %v973
    %1096 = vmatprep.subr.mxu0 0.0
    %1097 = vmatpush1.msra.mxu0 %v974
    %1098 = vmatprep.subr.mxu0 0.0
    %1099 = vmatpush1.msra.mxu0 %v975
    %1100 = vmatprep.subr.mxu0 0.0
    %1101 = vmatpush1.msra.mxu0 %v976
    %1102 = vmatprep.subr.mxu0 0.0
    %1103 = vmatpush1.msra.mxu0 %v977
    %1104 = vmatprep.subr.mxu0 0.0
    %1105 = vmatpush1.msra.mxu0 %v978
    %1106 = vmatprep.subr.mxu0 0.0
    %1107 = vmatpush1.msra.mxu0 %v979
    %1108 = vmatprep.subr.mxu0 0.0
    %1109 = vmatpush1.msra.mxu0 %v980
    %1110 = vmatprep.subr.mxu0 0.0
    %1111 = vmatpush1.msra.mxu0 %v981
    %1112 = vmatprep.subr.mxu0 0.0
    %1113 = vmatpush1.msra.mxu0 %v982
    %1114 = vmatprep.subr.mxu0 0.0
    %1115 = vmatpush1.msra.mxu0 %v983
    %1116 = vmatprep.subr.mxu0 0.0
    %1117 = vmatpush1.msra.mxu0 %v984
    %1118 = vmatprep.subr.mxu0 0.0
    %1119 = vmatpush1.msra.mxu0 %v985
    %1120 = vmatprep.mubr.f32.mxu0 %v921
    %1121 = vmatmul.mubr.f32.gmra.mrb[0].mxu0 %v920
    %v1122 = vpop.f32.mrb[0].mxu0
    %v1123 = vadd.f32 %v1053, %v1122
    %v1124 = vpop.f32.mrb[0].mxu0
    %1125 = vdwg.mxu0
    %v1126 = vld [vmem:[%s5] sm:$0x3]
    %v1127 = vld [vmem:[%s6] sm:$0x3]
    %1129 = vset.pattern.permute.xlu0 0
    %1130 = vperm.xlu0 %1129, %v1127
    %v1131 = vpop.permute.xlu0 %1130
    %vm1133 = vcmask 64512
    %v1135 = vsel %vm1133, %v1126, 0
    %1137 = vmatprep.subr.mxu0 0.0
    %1138 = vmatpush1.msra.mxu0 %v1123
    %1139 = vmatprep.subr.mxu0 0.0
    %1140 = vmatpush1.msra.mxu0 0.0
    %1141 = vmatprep.subr.mxu0 0.0
    %1142 = vmatpush1.msra.mxu0 0.0
    %1143 = vmatprep.subr.mxu0 0.0
    %1144 = vmatpush1.msra.mxu0 0.0
    %1145 = vmatprep.subr.mxu0 0.0
    %1146 = vmatpush1.msra.mxu0 0.0
    %1147 = vmatprep.subr.mxu0 0.0
    %1148 = vmatpush1.msra.mxu0 0.0
    %1149 = vmatprep.subr.mxu0 0.0
    %1150 = vmatpush1.msra.mxu0 0.0
    %1151 = vmatprep.subr.mxu0 0.0
    %1152 = vmatpush1.msra.mxu0 0.0
    %1153 = vmatprep.subr.mxu0 0.0
    %1154 = vmatpush1.msra.mxu0 0.0
    %1155 = vmatprep.subr.mxu0 0.0
    %1156 = vmatpush1.msra.mxu0 0.0
    %1157 = vmatprep.subr.mxu0 0.0
    %1158 = vmatpush1.msra.mxu0 0.0
    %1159 = vmatprep.subr.mxu0 0.0
    %1160 = vmatpush1.msra.mxu0 0.0
    %1161 = vmatprep.subr.mxu0 0.0
    %1162 = vmatpush1.msra.mxu0 0.0
    %1163 = vmatprep.subr.mxu0 0.0
    %1164 = vmatpush1.msra.mxu0 0.0
    %1165 = vmatprep.subr.mxu0 0.0
    %1166 = vmatpush1.msra.mxu0 0.0
    %1167 = vmatprep.subr.mxu0 0.0
    %1168 = vmatpush1.msra.mxu0 0.0
    %1169 = vmatprep.subr.mxu0 0.0
    %1170 = vmatpush1.msra.mxu0 0.0
    %1171 = vmatprep.subr.mxu0 0.0
    %1172 = vmatpush1.msra.mxu0 0.0
    %1173 = vmatprep.subr.mxu0 0.0
    %1174 = vmatpush1.msra.mxu0 0.0
    %1175 = vmatprep.subr.mxu0 0.0
    %1176 = vmatpush1.msra.mxu0 0.0
    %1177 = vmatprep.subr.mxu0 0.0
    %1178 = vmatpush1.msra.mxu0 0.0
    %1179 = vmatprep.subr.mxu0 0.0
    %1180 = vmatpush1.msra.mxu0 0.0
    %1181 = vmatprep.subr.mxu0 0.0
    %1182 = vmatpush1.msra.mxu0 0.0
    %1183 = vmatprep.subr.mxu0 0.0
    %1184 = vmatpush1.msra.mxu0 0.0
    %1185 = vmatprep.subr.mxu0 0.0
    %1186 = vmatpush1.msra.mxu0 0.0
    %1187 = vmatprep.subr.mxu0 0.0
    %1188 = vmatpush1.msra.mxu0 0.0
    %1189 = vmatprep.subr.mxu0 0.0
    %1190 = vmatpush1.msra.mxu0 0.0
    %1191 = vmatprep.subr.mxu0 0.0
    %1192 = vmatpush1.msra.mxu0 0.0
    %1193 = vmatprep.subr.mxu0 0.0
    %1194 = vmatpush1.msra.mxu0 0.0
    %1195 = vmatprep.subr.mxu0 0.0
    %1196 = vmatpush1.msra.mxu0 0.0
    %1197 = vmatprep.subr.mxu0 0.0
    %1198 = vmatpush1.msra.mxu0 0.0
    %1199 = vmatprep.subr.mxu0 0.0
    %1200 = vmatpush1.msra.mxu0 0.0
    %1201 = vmatprep.mubr.f32.mxu0 0.0
    %1202 = vmatmul.mubr.f32.gmra.mrb[0].mxu0 %v1135
    %v1203 = vpop.f32.mrb[0].mxu0
    %v1204 = vadd.f32 %v1131, %v1203
    %v1205 = vpop.f32.mrb[0].mxu0
    %1206 = vdwg.mxu0
    %v1207 = vmax.f32 %v1204, 0.0
    %v1208 = vld [vmem:[%s7] sm:$0xff]
    %v1209 = vld [vmem:[%s8] sm:$0xff]
    %1211 = vset.pattern.permute.xlu0 0
    %1212 = vperm.xlu0 %1211, %v1209
    %v1213 = vpop.permute.xlu0 %1212
    %vm1215 = vcmask 15360
    %v1217 = vsel %vm1215, %v1208, 0
    %vm1219 = vcmask 1041408
    %v1221 = vsel %vm1219, %v1207, 0
    %1223 = vmatprep.subr.mxu0 0.0
    %1224 = vmatpush1.msra.mxu0 %v1221
    %1225 = vmatprep.subr.mxu0 0.0
    %1226 = vmatpush1.msra.mxu0 0.0
    %1227 = vmatprep.subr.mxu0 0.0
    %1228 = vmatpush1.msra.mxu0 0.0
    %1229 = vmatprep.subr.mxu0 0.0
    %1230 = vmatpush1.msra.mxu0 0.0
    %1231 = vmatprep.subr.mxu0 0.0
    %1232 = vmatpush1.msra.mxu0 0.0
    %1233 = vmatprep.subr.mxu0 0.0
    %1234 = vmatpush1.msra.mxu0 0.0
    %1235 = vmatprep.subr.mxu0 0.0
    %1236 = vmatpush1.msra.mxu0 0.0
    %1237 = vmatprep.subr.mxu0 0.0
    %1238 = vmatpush1.msra.mxu0 0.0
    %1239 = vmatprep.subr.mxu0 0.0
    %1240 = vmatpush1.msra.mxu0 0.0
    %1241 = vmatprep.subr.mxu0 0.0
    %1242 = vmatpush1.msra.mxu0 0.0
    %1243 = vmatprep.subr.mxu0 0.0
    %1244 = vmatpush1.msra.mxu0 0.0
    %1245 = vmatprep.subr.mxu0 0.0
    %1246 = vmatpush1.msra.mxu0 0.0
    %1247 = vmatprep.subr.mxu0 0.0
    %1248 = vmatpush1.msra.mxu0 0.0
    %1249 = vmatprep.subr.mxu0 0.0
    %1250 = vmatpush1.msra.mxu0 0.0
    %1251 = vmatprep.subr.mxu0 0.0
    %1252 = vmatpush1.msra.mxu0 0.0
    %1253 = vmatprep.subr.mxu0 0.0
    %1254 = vmatpush1.msra.mxu0 0.0
    %1255 = vmatprep.subr.mxu0 0.0
    %1256 = vmatpush1.msra.mxu0 0.0
    %1257 = vmatprep.subr.mxu0 0.0
    %1258 = vmatpush1.msra.mxu0 0.0
    %1259 = vmatprep.subr.mxu0 0.0
    %1260 = vmatpush1.msra.mxu0 0.0
    %1261 = vmatprep.subr.mxu0 0.0
    %1262 = vmatpush1.msra.mxu0 0.0
    %1263 = vmatprep.subr.mxu0 0.0
    %1264 = vmatpush1.msra.mxu0 0.0
    %1265 = vmatprep.subr.mxu0 0.0
    %1266 = vmatpush1.msra.mxu0 0.0
    %1267 = vmatprep.subr.mxu0 0.0
    %1268 = vmatpush1.msra.mxu0 0.0
    %1269 = vmatprep.subr.mxu0 0.0
    %1270 = vmatpush1.msra.mxu0 0.0
    %1271 = vmatprep.subr.mxu0 0.0
    %1272 = vmatpush1.msra.mxu0 0.0
    %1273 = vmatprep.subr.mxu0 0.0
    %1274 = vmatpush1.msra.mxu0 0.0
    %1275 = vmatprep.subr.mxu0 0.0
    %1276 = vmatpush1.msra.mxu0 0.0
    %1277 = vmatprep.subr.mxu0 0.0
    %1278 = vmatpush1.msra.mxu0 0.0
    %1279 = vmatprep.subr.mxu0 0.0
    %1280 = vmatpush1.msra.mxu0 0.0
    %1281 = vmatprep.subr.mxu0 0.0
    %1282 = vmatpush1.msra.mxu0 0.0
    %1283 = vmatprep.subr.mxu0 0.0
    %1284 = vmatpush1.msra.mxu0 0.0
    %1285 = vmatprep.subr.mxu0 0.0
    %1286 = vmatpush1.msra.mxu0 0.0
    %1287 = vmatprep.mubr.f32.mxu0 0.0
    %1288 = vmatmul.mubr.f32.gmra.mrb[0].mxu0 %v1217
    %v1289 = vpop.f32.mrb[0].mxu0
    %v1290 = vadd.f32 %v1213, %v1289
    %v1291 = vpop.f32.mrb[0].mxu0
    %1292 = vdwg.mxu0
    %v1293 = vxor.u32 %v1290, 2147483648
    %v1294 = vmul.f32 %v1293, 1.442695
    %v1295 = vpow.pop %v1294
    %v1296 = vadd.f32 %v1295, 1.0
    %v1297 = vrcp.pop %v1296
    %v1298 = vmul.f32 1.0, %v1297
    %v1299 = vld [vmem:[%s11] sm:$0xff]
    %v1301 = vcombine.high %v1299, %v1299
    %v1303 = vunpack.c.l.s4 1983009808
    %v1304 = vunpack.c.0.s8 %v1303
    %v1305 = vlaneseq
    %v1306 = vshrl.u32 %v1305, 7
    %v1307 = vsub.s32 %v1304, %v1306
    %v1308 = vrot.slane %v1299, %v1307
    %v1310 = vunpack.c.l.s4 1983009808
    %v1311 = vunpack.c.0.s8 %v1310
    %v1312 = vlaneseq
    %v1313 = vshrl.u32 %v1312, 7
    %v1314 = vsub.s32 %v1311, %v1313
    %v1315 = vrot.slane %v1301, %v1314
    %v1316 = vcombine.high %v1308, %v1308
    %v1317 = vcombine.high %v1315, %v1315
    %v1319 = vsel %vm1215, %v1298, 0
    %v1321 = vsel %vm1219, %v1308, 0
    %v1323 = vsel %vm1219, %v1316, 0
    %v1325 = vsel %vm1219, %v1315, 0
    %v1327 = vsel %vm1219, %v1317, 0
    %1329 = vmatprep.subr.mxu0 %v1323
    %1330 = vmatpush1.msra.mxu0 %v1321
    %1331 = vmatprep.subr.mxu0 0.0
    %1332 = vmatpush1.msra.mxu0 0.0
    %1333 = vmatprep.subr.mxu0 0.0
    %1334 = vmatpush1.msra.mxu0 0.0
    %1335 = vmatprep.subr.mxu0 0.0
    %1336 = vmatpush1.msra.mxu0 0.0
    %1337 = vmatprep.subr.mxu0 0.0
    %1338 = vmatpush1.msra.mxu0 0.0
    %1339 = vmatprep.subr.mxu0 0.0
    %1340 = vmatpush1.msra.mxu0 0.0
    %1341 = vmatprep.subr.mxu0 0.0
    %1342 = vmatpush1.msra.mxu0 0.0
    %1343 = vmatprep.subr.mxu0 0.0
    %1344 = vmatpush1.msra.mxu0 0.0
    %1345 = vmatprep.subr.mxu0 0.0
    %1346 = vmatpush1.msra.mxu0 0.0
    %1347 = vmatprep.subr.mxu0 0.0
    %1348 = vmatpush1.msra.mxu0 0.0
    %1349 = vmatprep.subr.mxu0 0.0
    %1350 = vmatpush1.msra.mxu0 0.0
    %1351 = vmatprep.subr.mxu0 0.0
    %1352 = vmatpush1.msra.mxu0 0.0
    %1353 = vmatprep.subr.mxu0 0.0
    %1354 = vmatpush1.msra.mxu0 0.0
    %1355 = vmatprep.subr.mxu0 0.0
    %1356 = vmatpush1.msra.mxu0 0.0
    %1357 = vmatprep.subr.mxu0 0.0
    %1358 = vmatpush1.msra.mxu0 0.0
    %1359 = vmatprep.subr.mxu0 0.0
    %1360 = vmatpush1.msra.mxu0 0.0
    %1361 = vmatprep.subr.mxu0 0.0
    %1362 = vmatpush1.msra.mxu0 0.0
    %1363 = vmatprep.subr.mxu0 0.0
    %1364 = vmatpush1.msra.mxu0 0.0
    %1365 = vmatprep.subr.mxu0 0.0
    %1366 = vmatpush1.msra.mxu0 0.0
    %1367 = vmatprep.subr.mxu0 0.0
    %1368 = vmatpush1.msra.mxu0 0.0
    %1369 = vmatprep.subr.mxu0 0.0
    %1370 = vmatpush1.msra.mxu0 0.0
    %1371 = vmatprep.subr.mxu0 0.0
    %1372 = vmatpush1.msra.mxu0 0.0
    %1373 = vmatprep.subr.mxu0 0.0
    %1374 = vmatpush1.msra.mxu0 0.0
    %1375 = vmatprep.subr.mxu0 0.0
    %1376 = vmatpush1.msra.mxu0 0.0
    %1377 = vmatprep.subr.mxu0 0.0
    %1378 = vmatpush1.msra.mxu0 0.0
    %1379 = vmatprep.subr.mxu0 0.0
    %1380 = vmatpush1.msra.mxu0 0.0
    %1381 = vmatprep.subr.mxu0 0.0
    %1382 = vmatpush1.msra.mxu0 0.0
    %1383 = vmatprep.subr.mxu0 0.0
    %1384 = vmatpush1.msra.mxu0 0.0
    %1385 = vmatprep.subr.mxu0 0.0
    %1386 = vmatpush1.msra.mxu0 0.0
    %1387 = vmatprep.subr.mxu0 0.0
    %1388 = vmatpush1.msra.mxu0 0.0
    %1389 = vmatprep.subr.mxu0 0.0
    %1390 = vmatpush1.msra.mxu0 0.0
    %1391 = vmatprep.subr.mxu0 0.0
    %1392 = vmatpush1.msra.mxu0 0.0
    %1393 = vmatprep.mubr.f32.mxu0 0.0
    %1394 = vmatmul.mubr.f32.gmra.mrb[0].mxu0 %v1319
    %v1395 = vpop.f32.mrb[0].mxu0
    %v1396 = vadd.f32 0.0, %v1395
    %v1397 = vpop.f32.mrb[0].mxu0
    %v1398 = vadd.f32 0.0, %v1397
    %1399 = vdwg.mxu0
    %1400 = vmatprep.subr.mxu0 %v1327
    %1401 = vmatpush1.msra.mxu0 %v1325
    %1402 = vmatprep.subr.mxu0 0.0
    %1403 = vmatpush1.msra.mxu0 0.0
    %1404 = vmatprep.subr.mxu0 0.0
    %1405 = vmatpush1.msra.mxu0 0.0
    %1406 = vmatprep.subr.mxu0 0.0
    %1407 = vmatpush1.msra.mxu0 0.0
    %1408 = vmatprep.subr.mxu0 0.0
    %1409 = vmatpush1.msra.mxu0 0.0
    %1410 = vmatprep.subr.mxu0 0.0
    %1411 = vmatpush1.msra.mxu0 0.0
    %1412 = vmatprep.subr.mxu0 0.0
    %1413 = vmatpush1.msra.mxu0 0.0
    %1414 = vmatprep.subr.mxu0 0.0
    %1415 = vmatpush1.msra.mxu0 0.0
    %1416 = vmatprep.subr.mxu0 0.0
    %1417 = vmatpush1.msra.mxu0 0.0
    %1418 = vmatprep.subr.mxu0 0.0
    %1419 = vmatpush1.msra.mxu0 0.0
    %1420 = vmatprep.subr.mxu0 0.0
    %1421 = vmatpush1.msra.mxu0 0.0
    %1422 = vmatprep.subr.mxu0 0.0
    %1423 = vmatpush1.msra.mxu0 0.0
    %1424 = vmatprep.subr.mxu0 0.0
    %1425 = vmatpush1.msra.mxu0 0.0
    %1426 = vmatprep.subr.mxu0 0.0
    %1427 = vmatpush1.msra.mxu0 0.0
    %1428 = vmatprep.subr.mxu0 0.0
    %1429 = vmatpush1.msra.mxu0 0.0
    %1430 = vmatprep.subr.mxu0 0.0
    %1431 = vmatpush1.msra.mxu0 0.0
    %1432 = vmatprep.subr.mxu0 0.0
    %1433 = vmatpush1.msra.mxu0 0.0
    %1434 = vmatprep.subr.mxu0 0.0
    %1435 = vmatpush1.msra.mxu0 0.0
    %1436 = vmatprep.subr.mxu0 0.0
    %1437 = vmatpush1.msra.mxu0 0.0
    %1438 = vmatprep.subr.mxu0 0.0
    %1439 = vmatpush1.msra.mxu0 0.0
    %1440 = vmatprep.subr.mxu0 0.0
    %1441 = vmatpush1.msra.mxu0 0.0
    %1442 = vmatprep.subr.mxu0 0.0
    %1443 = vmatpush1.msra.mxu0 0.0
    %1444 = vmatprep.subr.mxu0 0.0
    %1445 = vmatpush1.msra.mxu0 0.0
    %1446 = vmatprep.subr.mxu0 0.0
    %1447 = vmatpush1.msra.mxu0 0.0
    %1448 = vmatprep.subr.mxu0 0.0
    %1449 = vmatpush1.msra.mxu0 0.0
    %1450 = vmatprep.subr.mxu0 0.0
    %1451 = vmatpush1.msra.mxu0 0.0
    %1452 = vmatprep.subr.mxu0 0.0
    %1453 = vmatpush1.msra.mxu0 0.0
    %1454 = vmatprep.subr.mxu0 0.0
    %1455 = vmatpush1.msra.mxu0 0.0
    %1456 = vmatprep.subr.mxu0 0.0
    %1457 = vmatpush1.msra.mxu0 0.0
    %1458 = vmatprep.subr.mxu0 0.0
    %1459 = vmatpush1.msra.mxu0 0.0
    %1460 = vmatprep.subr.mxu0 0.0
    %1461 = vmatpush1.msra.mxu0 0.0
    %1462 = vmatprep.subr.mxu0 0.0
    %1463 = vmatpush1.msra.mxu0 0.0
    %1464 = vmatprep.mubr.f32.mxu0 0.0
    %1465 = vmatmul.mubr.f32.gmra.mrb[0].mxu0 %v1319
    %v1466 = vpop.f32.mrb[0].mxu0
    %v1467 = vadd.f32 0.0, %v1466
    %v1468 = vpop.f32.mrb[0].mxu0
    %v1469 = vadd.f32 0.0, %v1468
    %1470 = vdwg.mxu0
    %v1471 = vmul.f32 %v918, %v1396
    %v1472 = vmul.f32 %v919, %v1398
    %v1473 = vmul.f32 %v920, %v1467
    %v1474 = vmul.f32 %v921, %v1469
    %v1475 = vadd.f32 %v1471, %v54
    %v1476 = vadd.f32 %v1472, %v55
    %v1477 = vadd.f32 %v1473, %v56
    %v1478 = vadd.f32 %v1474, %v57
    %1479 = vst [vmem:[#allocation5] sm:$0xff] %v1475
    %1480 = vst [vmem:[#allocation5 + $0x8] sm:$0xff] %v1476
    %1481 = vst [vmem:[#allocation5 + $0x10] sm:$0xff] %v1477
    %1482 = vst [vmem:[#allocation5 + $0x18] sm:$0xff] %v1478
    // Predicated region
    $region54: #{tpu_custom_call.1} parent=1 // pred_check
      _
    $region55: #{tpu_custom_call.1} parent=1 // pred_check_branch
      %1484 = sbr.rel (0) target = $region57
    $region56: #{tpu_custom_call.1} parent=1 // pred_region
      %s1486 = ssub.s32 512, 512
      %1487 = vsyncadd [#allocation4], %s1486
      %s1489 = sshll.u32 [#allocation5], 4
      %s1490 = int_to_ptr.vmem [resolvable:$true] %s1489
      %1492 = dma.vmem_to_hbm [thread:$0]  %s1490, 512, %s12, [#allocation4]
    $region57: #{tpu_custom_call.1} parent=1 // pred_fallthru
      _
    // Predicated region
    $region58: #{tpu_custom_call.1} parent=1 // pred_check
      _
    $region59: #{tpu_custom_call.1} parent=1 // pred_check_branch
      %1494 = sbr.rel (0) target = $region61
    $region60: #{tpu_custom_call.1} parent=1 // pred_region
      %1495 = dma.done [#allocation4], 512
    $region61: #{tpu_custom_call.1} parent=1 // pred_fallthru
      _
    %1496 = vsyncpa [#allocation3], 1
    %1497 = vsyncpa [#allocation4], 1

</llo_original>
